<compile_context>
chip_gen: v7x
topology: tpu7x:2x2x1
jax: 0.10.0
libtpu: 0.0.40
codegen_flags: <defaults>
</compile_context>

<pallas_src>
import functools

import jax
import jax.numpy as jnp
from jax.experimental import pallas as pl
from jax.experimental.pallas import tpu as pltpu

APP_LSD = 32
DYN_LSD = 32                      # must equal APP_LSD (see note above)
PROC_PATH_LENGTH = 4
HID1, HID2 = 100, 50
HID1_PAD, HID2_PAD = 128, 64      # lane-friendly padded hidden widths (zero pad is inert)
NEG_SLOPE = 0.01                  # F.leaky_relu default negative_slope

MOD_ROWS = APP_LSD + HID1_PAD + HID2_PAD       # 224 packed weight rows per ObservationModule
OUT_WIDTH = (PROC_PATH_LENGTH + 1) * APP_LSD   # 160


def _leaky_relu(x):
    return jnp.where(x >= 0, x, NEG_SLOPE * x)


def sequential_kernel(w_ref, wpre_ref, wmods_ref, bias_ref, out_ref, *,
                      n_mods, mm_dtype):
    """Whole Sequential.forward for one batch tile, fully VMEM-resident.

    w_ref     : (TB, DYN_LSD)                       batch tile
    wpre_ref  : (DYN_LSD, P*128 + 32)               [W1_w[0] | .. | W1_w[P-1] | W0]
    wmods_ref : (P*224, 128)  per module: rows [W1_z (32) ; W2 (128) ; W3 (64)],
                W2/W3 zero-padded to 128 lanes
    bias_ref  : (3P+1, 128)   rows 3p=b1, 3p+1=b2, 3p+2=b3 (lane-0 based), row 3P=b0
    out_ref   : (TB, (P+1)*APP_LSD)                 lane-concatenated recon path
    """
    w = w_ref[...].astype(mm_dtype)

    # One lane-dense matmul covering every loop-invariant w-projection AND lin1.
    pre = jnp.dot(w, wpre_ref[...], preferred_element_type=jnp.float32)

    bias = bias_ref[...]                                   # tiny (13,128) f32 slab
    b0 = bias[3 * n_mods:3 * n_mods + 1, :APP_LSD]

    # z_1 = sigmoid(lin1(w));  lin1 slice starts at lane offset P*128 (aligned).
    z = jax.nn.sigmoid(pre[:, n_mods * HID1_PAD:n_mods * HID1_PAD + APP_LSD] + b0)
    out_ref[:, 0:APP_LSD] = z.astype(out_ref.dtype)

    # Inherently sequential chain over the observation modules (small, static).
    for p in range(n_mods):
        r0 = p * MOD_ROWS
        w1z = wmods_ref[r0:r0 + APP_LSD, :]                              # (32, 128)
        w2 = wmods_ref[r0 + APP_LSD:r0 + APP_LSD + HID1_PAD, :HID2_PAD]  # (128, 64)
        w3 = wmods_ref[r0 + APP_LSD + HID1_PAD:r0 + MOD_ROWS, :APP_LSD]  # (64, 32)
        b1 = bias[3 * p:3 * p + 1, :HID1_PAD]
        b2 = bias[3 * p + 1:3 * p + 2, :HID2_PAD]
        b3 = bias[3 * p + 2:3 * p + 3, :APP_LSD]

        w_proj = pre[:, p * HID1_PAD:(p + 1) * HID1_PAD]   # 128-lane aligned slice

        h = _leaky_relu(
            jnp.dot(z.astype(mm_dtype), w1z, preferred_element_type=jnp.float32)
            + w_proj + b1)
        h = _leaky_relu(
            jnp.dot(h.astype(mm_dtype), w2, preferred_element_type=jnp.float32) + b2)
        z = jax.nn.sigmoid(
            jnp.dot(h.astype(mm_dtype), w3, preferred_element_type=jnp.float32) + b3)

        out_ref[:, (p + 1) * APP_LSD:(p + 2) * APP_LSD] = z.astype(out_ref.dtype)


def _pack_params(params, mm_dtype):
    """Pad hidden dims to lane-friendly sizes and pack all weights/biases."""
    P = params["W1"].shape[0]
    W1p = jnp.pad(params["W1"], ((0, 0), (0, 0), (0, HID1_PAD - HID1)))
    b1p = jnp.pad(params["b1"], ((0, 0), (0, 0), (0, HID1_PAD - HID1)))
    W2p = jnp.pad(params["W2"], ((0, 0), (0, HID1_PAD - HID1), (0, HID2_PAD - HID2)))
    b2p = jnp.pad(params["b2"], ((0, 0), (0, 0), (0, HID2_PAD - HID2)))
    W3p = jnp.pad(params["W3"], ((0, 0), (0, HID2_PAD - HID2), (0, 0)))

    W1_w = W1p[:, :APP_LSD, :]     # acts on w (loop-invariant)
    W1_z = W1p[:, APP_LSD:, :]     # acts on z (per step)

    # Packed precompute weight: [W1_w[0] | ... | W1_w[P-1] | W0]  -> (32, P*128+32)
    # so per-step slices of `pre` are 128-lane aligned and lin1 starts at P*128.
    Wpre = jnp.concatenate([W1_w[p] for p in range(P)] + [params["W0"]], axis=1)

    # Per-module weight slab, sublane-stacked, all lane-offset-0 slices in kernel.
    blocks = []
    for p in range(P):
        blocks.append(W1_z[p])                                                 # (32,128)
        blocks.append(jnp.pad(W2p[p], ((0, 0), (0, HID1_PAD - HID2_PAD))))     # (128,128)
        blocks.append(jnp.pad(W3p[p], ((0, 0), (0, HID1_PAD - APP_LSD))))      # (64,128)
    Wmods = jnp.concatenate(blocks, axis=0)                                    # (P*224,128)

    # Bias slab (kept f32; added to f32 accumulators).
    rows = []
    for p in range(P):
        rows.append(b1p[p])                                                    # (1,128)
        rows.append(jnp.pad(b2p[p], ((0, 0), (0, HID1_PAD - HID2_PAD))))       # (1,128)
        rows.append(jnp.pad(params["b3"][p], ((0, 0), (0, HID1_PAD - APP_LSD))))
    rows.append(jnp.pad(params["b0"], ((0, 0), (0, HID1_PAD - APP_LSD))))      # b0 last
    Bias = jnp.concatenate(rows, axis=0).astype(jnp.float32)                   # (3P+1,128)

    return Wpre.astype(mm_dtype), Wmods.astype(mm_dtype), Bias


def _choose_tile_b(B):
    # Bounded tile (VMEM-safe: `pre` is ~2.2 KB f32 per row), >=2 grid steps
    # whenever B allows (v7x: 2 TensorCores), and >=256 preferred for MXU-M fill.
    for cand in (1024, 512, 256, 128, 64, 32, 16, 8):
        if B >= 2 * cand:
            return cand
    return max(min(B, 8), 1)


def sequential_forward(w, params, *, tile_b=None, matmul_dtype=jnp.bfloat16):
    B, d = w.shape
    assert d == DYN_LSD and DYN_LSD == APP_LSD, "module requires DYN_LSD == APP_LSD"
    P = params["W1"].shape[0]
    out_width = (P + 1) * APP_LSD
    pre_width = P * HID1_PAD + APP_LSD

    Wpre, Wmods, Bias = _pack_params(params, matmul_dtype)

    if tile_b is None:
        tile_b = _choose_tile_b(B)
    grid_b = pl.cdiv(B, tile_b)
    B_pad = grid_b * tile_b
    if B_pad != B:
        # Zero-pad the ragged tail; padded rows compute finite garbage and are sliced off.
        w = jnp.pad(w, ((0, B_pad - B), (0, 0)))

    kernel = functools.partial(sequential_kernel, n_mods=P, mm_dtype=matmul_dtype)

    const2 = lambda i: (0, 0)
    in_specs = [
        pl.BlockSpec((tile_b, DYN_LSD), lambda i: (i, 0)),
        pl.BlockSpec((DYN_LSD, pre_width), const2),
        pl.BlockSpec((P * MOD_ROWS, HID1_PAD), const2),
        pl.BlockSpec((3 * P + 1, HID1_PAD), const2),
    ]
    out_specs = pl.BlockSpec((tile_b, out_width), lambda i: (i, 0))

    out = pl.pallas_call(
        kernel,
        out_shape=jax.ShapeDtypeStruct((B_pad, out_width), w.dtype),
        grid=(grid_b,),
        in_specs=in_specs,
        out_specs=out_specs,
        compiler_params=pltpu.CompilerParams(
            dimension_semantics=("parallel",)),
    )(w, Wpre, Wmods, Bias)

    # Lane-concatenated slab -> PyTorch layout (B, P+1, APP_LSD): pure reshape.
    return out[:B].reshape(B, P + 1, APP_LSD)


def init_params(key):
    """Deterministic synthetic weights, shaped per the module's __init__."""
    ks = jax.random.split(key, 8)
    s = 0.1
    P = PROC_PATH_LENGTH
    return {
        # Sequential.lin1 : Linear(DYN_LSD, APP_LSD), stored as (in, out)
        "W0": s * jax.random.normal(ks[0], (DYN_LSD, APP_LSD), jnp.float32),
        "b0": s * jax.random.normal(ks[1], (1, APP_LSD), jnp.float32),
        # ObservationModule.lin1 : Linear(2*APP_LSD, 100), stacked over P modules
        "W1": s * jax.random.normal(ks[2], (P, 2 * APP_LSD, HID1), jnp.float32),
        "b1": s * jax.random.normal(ks[3], (P, 1, HID1), jnp.float32),
        # ObservationModule.lin2 : Linear(100, 50)
        "W2": s * jax.random.normal(ks[4], (P, HID1, HID2), jnp.float32),
        "b2": s * jax.random.normal(ks[5], (P, 1, HID2), jnp.float32),
        # ObservationModule.lin3 : Linear(50, APP_LSD)
        "W3": s * jax.random.normal(ks[6], (P, HID2, APP_LSD), jnp.float32),
        "b3": s * jax.random.normal(ks[7], (P, 1, APP_LSD), jnp.float32),
    }


def reference_forward(w, params):
    """Pure-JAX mirror of the PyTorch forward, for verification."""
    z = jax.nn.sigmoid(w @ params["W0"] + params["b0"])
    path = [z]
    for p in range(params["W1"].shape[0]):
        x = jnp.concatenate([w, path[-1]], axis=1)
        h = _leaky_relu(x @ params["W1"][p] + params["b1"][p])
        h = _leaky_relu(h @ params["W2"][p] + params["b2"][p])
        path.append(jax.nn.sigmoid(h @ params["W3"][p] + params["b3"][p]))
    return jnp.stack(path, axis=1)


if __name__ == "__main__":
    key = jax.random.PRNGKey(0)
    k_w, k_p = jax.random.split(key)
    B = 16
    w = jax.random.normal(k_w, (B, DYN_LSD), jnp.float32)
    params = init_params(k_p)
    ref = reference_forward(w, params)

    # Exact-semantics path (f32 MXU operands); tile_b=8 -> grid of 2 tiles exercised.
    out_f32 = jax.block_until_ready(
        sequential_forward(w, params, tile_b=8, matmul_dtype=jnp.float32))
    assert out_f32.shape == (B, PROC_PATH_LENGTH + 1, APP_LSD), out_f32.shape
    assert jnp.allclose(out_f32, ref, atol=1e-5, rtol=1e-5), "f32 mismatch vs reference"

    # Default fast path: bf16 MXU operands, f32 accumulation and activation math.
    out_bf16 = jax.block_until_ready(sequential_forward(w, params, tile_b=8))
    assert jnp.allclose(out_bf16, ref, atol=2e-2, rtol=2e-2), "bf16 mismatch vs reference"

    # Ragged batch exercising the cdiv grid + zero-pad tail path.
    w_odd = jax.random.normal(k_w, (11, DYN_LSD), jnp.float32)
    out_odd = jax.block_until_ready(
        sequential_forward(w_odd, params, matmul_dtype=jnp.float32))
    assert jnp.allclose(out_odd, reference_forward(w_odd, params),
                        atol=1e-5, rtol=1e-5), "ragged-batch mismatch vs reference"

    print("KERNEL_OK")
</pallas_src>

<mosaic_0001>
module attributes {stable_mosaic.version = 11 : i64} {
  func.func @sequential_kernel(%arg0: i32, %arg1: memref<8x32xf32, #tpu.memory_space<vmem>>, %arg2: memref<32x544xf32, #tpu.memory_space<vmem>>, %arg3: memref<896x128xf32, #tpu.memory_space<vmem>>, %arg4: memref<13x128xf32, #tpu.memory_space<vmem>>, %arg5: memref<8x160xf32, #tpu.memory_space<vmem>>) attributes {dimension_semantics = [#tpu.dimension_semantics<parallel>], iteration_bounds = array<i64: 2>, scalar_prefetch = 0 : i64, scratch_operands = 0 : i64, tpu.core_type = #tpu.core_type<tc>, window_params = [{transform_indices = @transform_0, window_bounds = array<i64: 8, 32>}, {pipeline_mode = #tpu.pipeline_mode<synchronous>, transform_indices = @transform_1, window_bounds = array<i64: 32, 544>}, {pipeline_mode = #tpu.pipeline_mode<synchronous>, transform_indices = @transform_2, window_bounds = array<i64: 896, 128>}, {pipeline_mode = #tpu.pipeline_mode<synchronous>, transform_indices = @transform_3, window_bounds = array<i64: 13, 128>}, {transform_indices = @transform_4, window_bounds = array<i64: 8, 160>}]} {
    %c0 = arith.constant 0 : index
    %c0_0 = arith.constant 0 : index
    %0 = vector.load %arg1[%c0, %c0_0] : memref<8x32xf32, #tpu.memory_space<vmem>>, vector<8x32xf32>
    %c0_1 = arith.constant 0 : index
    %c0_2 = arith.constant 0 : index
    %1 = vector.load %arg2[%c0_1, %c0_2] : memref<32x544xf32, #tpu.memory_space<vmem>>, vector<32x544xf32>
    %cst = arith.constant dense<0.000000e+00> : vector<8x544xf32>
    %2 = tpu.matmul %0, %1, %cst {dimension_numbers = #tpu.dot_dimension_numbers<[1], [0], [0], [1], [0, 0, 1, 1], [], []>} : vector<8x32xf32>, vector<32x544xf32>, vector<8x544xf32> -> vector<8x544xf32>
    %c0_3 = arith.constant 0 : index
    %c0_4 = arith.constant 0 : index
    %3 = vector.load %arg4[%c0_3, %c0_4] : memref<13x128xf32, #tpu.memory_space<vmem>>, vector<13x128xf32>
    %4 = vector.extract_strided_slice %3 {offsets = [12, 0], sizes = [1, 32], strides = [1, 1]} : vector<13x128xf32> to vector<1x32xf32>
    %5 = vector.extract_strided_slice %2 {offsets = [0, 512], sizes = [8, 32], strides = [1, 1]} : vector<8x544xf32> to vector<8x32xf32>
    %6 = vector.broadcast %4 : vector<1x32xf32> to vector<8x32xf32>
    %7 = arith.addf %5, %6 : vector<8x32xf32>
    %8 = arith.negf %7 : vector<8x32xf32>
    %9 = math.exp %8 : vector<8x32xf32>
    %cst_5 = arith.constant 1.000000e+00 : f32
    %10 = vector.broadcast %cst_5 : f32 to vector<8x32xf32>
    %11 = arith.addf %10, %9 : vector<8x32xf32>
    %12 = arith.divf %10, %11 : vector<8x32xf32>
    %c0_6 = arith.constant 0 : index
    %c0_7 = arith.constant 0 : index
    %13 = vector.load %arg5[%c0_6, %c0_7] : memref<8x160xf32, #tpu.memory_space<vmem>>, vector<8x32xf32>
    tpu.vector_store %arg5[%c0_6, %c0_7], %12 {strides = array<i32>} : memref<8x160xf32, #tpu.memory_space<vmem>>, vector<8x32xf32>,
    %c0_8 = arith.constant 0 : index
    %c0_9 = arith.constant 0 : index
    %14 = vector.load %arg3[%c0_8, %c0_9] : memref<896x128xf32, #tpu.memory_space<vmem>>, vector<32x128xf32>
    %c32 = arith.constant 32 : index
    %c0_10 = arith.constant 0 : index
    %15 = vector.load %arg3[%c32, %c0_10] : memref<896x128xf32, #tpu.memory_space<vmem>>, vector<128x64xf32>
    %c160 = arith.constant 160 : index
    %c0_11 = arith.constant 0 : index
    %16 = vector.load %arg3[%c160, %c0_11] : memref<896x128xf32, #tpu.memory_space<vmem>>, vector<64x32xf32>
    %17 = vector.extract_strided_slice %3 {offsets = [0, 0], sizes = [1, 128], strides = [1, 1]} : vector<13x128xf32> to vector<1x128xf32>
    %18 = vector.extract_strided_slice %3 {offsets = [1, 0], sizes = [1, 64], strides = [1, 1]} : vector<13x128xf32> to vector<1x64xf32>
    %19 = vector.extract_strided_slice %3 {offsets = [2, 0], sizes = [1, 32], strides = [1, 1]} : vector<13x128xf32> to vector<1x32xf32>
    %20 = vector.extract_strided_slice %2 {offsets = [0, 0], sizes = [8, 128], strides = [1, 1]} : vector<8x544xf32> to vector<8x128xf32>
    %cst_12 = arith.constant dense<0.000000e+00> : vector<8x128xf32>
    %21 = tpu.matmul %12, %14, %cst_12 {dimension_numbers = #tpu.dot_dimension_numbers<[1], [0], [0], [1], [0, 0, 1, 1], [], []>} : vector<8x32xf32>, vector<32x128xf32>, vector<8x128xf32> -> vector<8x128xf32>
    %22 = arith.addf %21, %20 : vector<8x128xf32>
    %23 = vector.broadcast %17 : vector<1x128xf32> to vector<8x128xf32>
    %24 = arith.addf %22, %23 : vector<8x128xf32>
    %cst_13 = arith.constant 0.000000e+00 : f32
    %25 = vector.broadcast %cst_13 : f32 to vector<8x128xf32>
    %26 = arith.cmpf oge, %24, %25 : vector<8x128xf32>
    %cst_14 = arith.constant 0.00999999977 : f32
    %27 = vector.broadcast %cst_14 : f32 to vector<8x128xf32>
    %28 = arith.mulf %27, %24 : vector<8x128xf32>
    %29 = arith.select %26, %24, %28 : vector<8x128xi1>, vector<8x128xf32>
    %cst_15 = arith.constant dense<0.000000e+00> : vector<8x64xf32>
    %30 = tpu.matmul %29, %15, %cst_15 {dimension_numbers = #tpu.dot_dimension_numbers<[1], [0], [0], [1], [0, 0, 1, 1], [], []>} : vector<8x128xf32>, vector<128x64xf32>, vector<8x64xf32> -> vector<8x64xf32>
    %31 = vector.broadcast %18 : vector<1x64xf32> to vector<8x64xf32>
    %32 = arith.addf %30, %31 : vector<8x64xf32>
    %cst_16 = arith.constant 0.000000e+00 : f32
    %33 = vector.broadcast %cst_16 : f32 to vector<8x64xf32>
    %34 = arith.cmpf oge, %32, %33 : vector<8x64xf32>
    %cst_17 = arith.constant 0.00999999977 : f32
    %35 = vector.broadcast %cst_17 : f32 to vector<8x64xf32>
    %36 = arith.mulf %35, %32 : vector<8x64xf32>
    %37 = arith.select %34, %32, %36 : vector<8x64xi1>, vector<8x64xf32>
    %cst_18 = arith.constant dense<0.000000e+00> : vector<8x32xf32>
    %38 = tpu.matmul %37, %16, %cst_18 {dimension_numbers = #tpu.dot_dimension_numbers<[1], [0], [0], [1], [0, 0, 1, 1], [], []>} : vector<8x64xf32>, vector<64x32xf32>, vector<8x32xf32> -> vector<8x32xf32>
    %39 = vector.broadcast %19 : vector<1x32xf32> to vector<8x32xf32>
    %40 = arith.addf %38, %39 : vector<8x32xf32>
    %41 = arith.negf %40 : vector<8x32xf32>
    %42 = math.exp %41 : vector<8x32xf32>
    %cst_19 = arith.constant 1.000000e+00 : f32
    %43 = vector.broadcast %cst_19 : f32 to vector<8x32xf32>
    %44 = arith.addf %43, %42 : vector<8x32xf32>
    %45 = arith.divf %43, %44 : vector<8x32xf32>
    %c0_20 = arith.constant 0 : index
    %c32_21 = arith.constant 32 : index
    %46 = vector.load %arg5[%c0_20, %c32_21] : memref<8x160xf32, #tpu.memory_space<vmem>>, vector<8x32xf32>
    tpu.vector_store %arg5[%c0_20, %c32_21], %45 {strides = array<i32>} : memref<8x160xf32, #tpu.memory_space<vmem>>, vector<8x32xf32>,
    %c224 = arith.constant 224 : index
    %c0_22 = arith.constant 0 : index
    %47 = vector.load %arg3[%c224, %c0_22] : memref<896x128xf32, #tpu.memory_space<vmem>>, vector<32x128xf32>
    %c256 = arith.constant 256 : index
    %c0_23 = arith.constant 0 : index
    %48 = vector.load %arg3[%c256, %c0_23] : memref<896x128xf32, #tpu.memory_space<vmem>>, vector<128x64xf32>
    %c384 = arith.constant 384 : index
    %c0_24 = arith.constant 0 : index
    %49 = vector.load %arg3[%c384, %c0_24] : memref<896x128xf32, #tpu.memory_space<vmem>>, vector<64x32xf32>
    %50 = vector.extract_strided_slice %3 {offsets = [3, 0], sizes = [1, 128], strides = [1, 1]} : vector<13x128xf32> to vector<1x128xf32>
    %51 = vector.extract_strided_slice %3 {offsets = [4, 0], sizes = [1, 64], strides = [1, 1]} : vector<13x128xf32> to vector<1x64xf32>
    %52 = vector.extract_strided_slice %3 {offsets = [5, 0], sizes = [1, 32], strides = [1, 1]} : vector<13x128xf32> to vector<1x32xf32>
    %53 = vector.extract_strided_slice %2 {offsets = [0, 128], sizes = [8, 128], strides = [1, 1]} : vector<8x544xf32> to vector<8x128xf32>
    %cst_25 = arith.constant dense<0.000000e+00> : vector<8x128xf32>
    %54 = tpu.matmul %45, %47, %cst_25 {dimension_numbers = #tpu.dot_dimension_numbers<[1], [0], [0], [1], [0, 0, 1, 1], [], []>} : vector<8x32xf32>, vector<32x128xf32>, vector<8x128xf32> -> vector<8x128xf32>
    %55 = arith.addf %54, %53 : vector<8x128xf32>
    %56 = vector.broadcast %50 : vector<1x128xf32> to vector<8x128xf32>
    %57 = arith.addf %55, %56 : vector<8x128xf32>
    %cst_26 = arith.constant 0.000000e+00 : f32
    %58 = vector.broadcast %cst_26 : f32 to vector<8x128xf32>
    %59 = arith.cmpf oge, %57, %58 : vector<8x128xf32>
    %cst_27 = arith.constant 0.00999999977 : f32
    %60 = vector.broadcast %cst_27 : f32 to vector<8x128xf32>
    %61 = arith.mulf %60, %57 : vector<8x128xf32>
    %62 = arith.select %59, %57, %61 : vector<8x128xi1>, vector<8x128xf32>
    %cst_28 = arith.constant dense<0.000000e+00> : vector<8x64xf32>
    %63 = tpu.matmul %62, %48, %cst_28 {dimension_numbers = #tpu.dot_dimension_numbers<[1], [0], [0], [1], [0, 0, 1, 1], [], []>} : vector<8x128xf32>, vector<128x64xf32>, vector<8x64xf32> -> vector<8x64xf32>
    %64 = vector.broadcast %51 : vector<1x64xf32> to vector<8x64xf32>
    %65 = arith.addf %63, %64 : vector<8x64xf32>
    %cst_29 = arith.constant 0.000000e+00 : f32
    %66 = vector.broadcast %cst_29 : f32 to vector<8x64xf32>
    %67 = arith.cmpf oge, %65, %66 : vector<8x64xf32>
    %cst_30 = arith.constant 0.00999999977 : f32
    %68 = vector.broadcast %cst_30 : f32 to vector<8x64xf32>
    %69 = arith.mulf %68, %65 : vector<8x64xf32>
    %70 = arith.select %67, %65, %69 : vector<8x64xi1>, vector<8x64xf32>
    %cst_31 = arith.constant dense<0.000000e+00> : vector<8x32xf32>
    %71 = tpu.matmul %70, %49, %cst_31 {dimension_numbers = #tpu.dot_dimension_numbers<[1], [0], [0], [1], [0, 0, 1, 1], [], []>} : vector<8x64xf32>, vector<64x32xf32>, vector<8x32xf32> -> vector<8x32xf32>
    %72 = vector.broadcast %52 : vector<1x32xf32> to vector<8x32xf32>
    %73 = arith.addf %71, %72 : vector<8x32xf32>
    %74 = arith.negf %73 : vector<8x32xf32>
    %75 = math.exp %74 : vector<8x32xf32>
    %cst_32 = arith.constant 1.000000e+00 : f32
    %76 = vector.broadcast %cst_32 : f32 to vector<8x32xf32>
    %77 = arith.addf %76, %75 : vector<8x32xf32>
    %78 = arith.divf %76, %77 : vector<8x32xf32>
    %c0_33 = arith.constant 0 : index
    %c64 = arith.constant 64 : index
    %79 = vector.load %arg5[%c0_33, %c64] : memref<8x160xf32, #tpu.memory_space<vmem>>, vector<8x32xf32>
    tpu.vector_store %arg5[%c0_33, %c64], %78 {strides = array<i32>} : memref<8x160xf32, #tpu.memory_space<vmem>>, vector<8x32xf32>,
    %c448 = arith.constant 448 : index
    %c0_34 = arith.constant 0 : index
    %80 = vector.load %arg3[%c448, %c0_34] : memref<896x128xf32, #tpu.memory_space<vmem>>, vector<32x128xf32>
    %c480 = arith.constant 480 : index
    %c0_35 = arith.constant 0 : index
    %81 = vector.load %arg3[%c480, %c0_35] : memref<896x128xf32, #tpu.memory_space<vmem>>, vector<128x64xf32>
    %c608 = arith.constant 608 : index
    %c0_36 = arith.constant 0 : index
    %82 = vector.load %arg3[%c608, %c0_36] : memref<896x128xf32, #tpu.memory_space<vmem>>, vector<64x32xf32>
    %83 = vector.extract_strided_slice %3 {offsets = [6, 0], sizes = [1, 128], strides = [1, 1]} : vector<13x128xf32> to vector<1x128xf32>
    %84 = vector.extract_strided_slice %3 {offsets = [7, 0], sizes = [1, 64], strides = [1, 1]} : vector<13x128xf32> to vector<1x64xf32>
    %85 = vector.extract_strided_slice %3 {offsets = [8, 0], sizes = [1, 32], strides = [1, 1]} : vector<13x128xf32> to vector<1x32xf32>
    %86 = vector.extract_strided_slice %2 {offsets = [0, 256], sizes = [8, 128], strides = [1, 1]} : vector<8x544xf32> to vector<8x128xf32>
    %cst_37 = arith.constant dense<0.000000e+00> : vector<8x128xf32>
    %87 = tpu.matmul %78, %80, %cst_37 {dimension_numbers = #tpu.dot_dimension_numbers<[1], [0], [0], [1], [0, 0, 1, 1], [], []>} : vector<8x32xf32>, vector<32x128xf32>, vector<8x128xf32> -> vector<8x128xf32>
    %88 = arith.addf %87, %86 : vector<8x128xf32>
    %89 = vector.broadcast %83 : vector<1x128xf32> to vector<8x128xf32>
    %90 = arith.addf %88, %89 : vector<8x128xf32>
    %cst_38 = arith.constant 0.000000e+00 : f32
    %91 = vector.broadcast %cst_38 : f32 to vector<8x128xf32>
    %92 = arith.cmpf oge, %90, %91 : vector<8x128xf32>
    %cst_39 = arith.constant 0.00999999977 : f32
    %93 = vector.broadcast %cst_39 : f32 to vector<8x128xf32>
    %94 = arith.mulf %93, %90 : vector<8x128xf32>
    %95 = arith.select %92, %90, %94 : vector<8x128xi1>, vector<8x128xf32>
    %cst_40 = arith.constant dense<0.000000e+00> : vector<8x64xf32>
    %96 = tpu.matmul %95, %81, %cst_40 {dimension_numbers = #tpu.dot_dimension_numbers<[1], [0], [0], [1], [0, 0, 1, 1], [], []>} : vector<8x128xf32>, vector<128x64xf32>, vector<8x64xf32> -> vector<8x64xf32>
    %97 = vector.broadcast %84 : vector<1x64xf32> to vector<8x64xf32>
    %98 = arith.addf %96, %97 : vector<8x64xf32>
    %cst_41 = arith.constant 0.000000e+00 : f32
    %99 = vector.broadcast %cst_41 : f32 to vector<8x64xf32>
    %100 = arith.cmpf oge, %98, %99 : vector<8x64xf32>
    %cst_42 = arith.constant 0.00999999977 : f32
    %101 = vector.broadcast %cst_42 : f32 to vector<8x64xf32>
    %102 = arith.mulf %101, %98 : vector<8x64xf32>
    %103 = arith.select %100, %98, %102 : vector<8x64xi1>, vector<8x64xf32>
    %cst_43 = arith.constant dense<0.000000e+00> : vector<8x32xf32>
    %104 = tpu.matmul %103, %82, %cst_43 {dimension_numbers = #tpu.dot_dimension_numbers<[1], [0], [0], [1], [0, 0, 1, 1], [], []>} : vector<8x64xf32>, vector<64x32xf32>, vector<8x32xf32> -> vector<8x32xf32>
    %105 = vector.broadcast %85 : vector<1x32xf32> to vector<8x32xf32>
    %106 = arith.addf %104, %105 : vector<8x32xf32>
    %107 = arith.negf %106 : vector<8x32xf32>
    %108 = math.exp %107 : vector<8x32xf32>
    %cst_44 = arith.constant 1.000000e+00 : f32
    %109 = vector.broadcast %cst_44 : f32 to vector<8x32xf32>
    %110 = arith.addf %109, %108 : vector<8x32xf32>
    %111 = arith.divf %109, %110 : vector<8x32xf32>
    %c0_45 = arith.constant 0 : index
    %c96 = arith.constant 96 : index
    %112 = vector.load %arg5[%c0_45, %c96] : memref<8x160xf32, #tpu.memory_space<vmem>>, vector<8x32xf32>
    tpu.vector_store %arg5[%c0_45, %c96], %111 {strides = array<i32>} : memref<8x160xf32, #tpu.memory_space<vmem>>, vector<8x32xf32>,
    %c672 = arith.constant 672 : index
    %c0_46 = arith.constant 0 : index
    %113 = vector.load %arg3[%c672, %c0_46] : memref<896x128xf32, #tpu.memory_space<vmem>>, vector<32x128xf32>
    %c704 = arith.constant 704 : index
    %c0_47 = arith.constant 0 : index
    %114 = vector.load %arg3[%c704, %c0_47] : memref<896x128xf32, #tpu.memory_space<vmem>>, vector<128x64xf32>
    %c832 = arith.constant 832 : index
    %c0_48 = arith.constant 0 : index
    %115 = vector.load %arg3[%c832, %c0_48] : memref<896x128xf32, #tpu.memory_space<vmem>>, vector<64x32xf32>
    %116 = vector.extract_strided_slice %3 {offsets = [9, 0], sizes = [1, 128], strides = [1, 1]} : vector<13x128xf32> to vector<1x128xf32>
    %117 = vector.extract_strided_slice %3 {offsets = [10, 0], sizes = [1, 64], strides = [1, 1]} : vector<13x128xf32> to vector<1x64xf32>
    %118 = vector.extract_strided_slice %3 {offsets = [11, 0], sizes = [1, 32], strides = [1, 1]} : vector<13x128xf32> to vector<1x32xf32>
    %119 = vector.extract_strided_slice %2 {offsets = [0, 384], sizes = [8, 128], strides = [1, 1]} : vector<8x544xf32> to vector<8x128xf32>
    %cst_49 = arith.constant dense<0.000000e+00> : vector<8x128xf32>
    %120 = tpu.matmul %111, %113, %cst_49 {dimension_numbers = #tpu.dot_dimension_numbers<[1], [0], [0], [1], [0, 0, 1, 1], [], []>} : vector<8x32xf32>, vector<32x128xf32>, vector<8x128xf32> -> vector<8x128xf32>
    %121 = arith.addf %120, %119 : vector<8x128xf32>
    %122 = vector.broadcast %116 : vector<1x128xf32> to vector<8x128xf32>
    %123 = arith.addf %121, %122 : vector<8x128xf32>
    %cst_50 = arith.constant 0.000000e+00 : f32
    %124 = vector.broadcast %cst_50 : f32 to vector<8x128xf32>
    %125 = arith.cmpf oge, %123, %124 : vector<8x128xf32>
    %cst_51 = arith.constant 0.00999999977 : f32
    %126 = vector.broadcast %cst_51 : f32 to vector<8x128xf32>
    %127 = arith.mulf %126, %123 : vector<8x128xf32>
    %128 = arith.select %125, %123, %127 : vector<8x128xi1>, vector<8x128xf32>
    %cst_52 = arith.constant dense<0.000000e+00> : vector<8x64xf32>
    %129 = tpu.matmul %128, %114, %cst_52 {dimension_numbers = #tpu.dot_dimension_numbers<[1], [0], [0], [1], [0, 0, 1, 1], [], []>} : vector<8x128xf32>, vector<128x64xf32>, vector<8x64xf32> -> vector<8x64xf32>
    %130 = vector.broadcast %117 : vector<1x64xf32> to vector<8x64xf32>
    %131 = arith.addf %129, %130 : vector<8x64xf32>
    %cst_53 = arith.constant 0.000000e+00 : f32
    %132 = vector.broadcast %cst_53 : f32 to vector<8x64xf32>
    %133 = arith.cmpf oge, %131, %132 : vector<8x64xf32>
    %cst_54 = arith.constant 0.00999999977 : f32
    %134 = vector.broadcast %cst_54 : f32 to vector<8x64xf32>
    %135 = arith.mulf %134, %131 : vector<8x64xf32>
    %136 = arith.select %133, %131, %135 : vector<8x64xi1>, vector<8x64xf32>
    %cst_55 = arith.constant dense<0.000000e+00> : vector<8x32xf32>
    %137 = tpu.matmul %136, %115, %cst_55 {dimension_numbers = #tpu.dot_dimension_numbers<[1], [0], [0], [1], [0, 0, 1, 1], [], []>} : vector<8x64xf32>, vector<64x32xf32>, vector<8x32xf32> -> vector<8x32xf32>
    %138 = vector.broadcast %118 : vector<1x32xf32> to vector<8x32xf32>
    %139 = arith.addf %137, %138 : vector<8x32xf32>
    %140 = arith.negf %139 : vector<8x32xf32>
    %141 = math.exp %140 : vector<8x32xf32>
    %cst_56 = arith.constant 1.000000e+00 : f32
    %142 = vector.broadcast %cst_56 : f32 to vector<8x32xf32>
    %143 = arith.addf %142, %141 : vector<8x32xf32>
    %144 = arith.divf %142, %143 : vector<8x32xf32>
    %c0_57 = arith.constant 0 : index
    %c128 = arith.constant 128 : index
    %145 = vector.load %arg5[%c0_57, %c128] : memref<8x160xf32, #tpu.memory_space<vmem>>, vector<8x32xf32>
    tpu.vector_store %arg5[%c0_57, %c128], %144 {strides = array<i32>} : memref<8x160xf32, #tpu.memory_space<vmem>>, vector<8x32xf32>,
    return
  }
  func.func @transform_0(%arg0: i32) -> (i32, i32) {
    %c0_i32 = arith.constant 0 : i32
    %c0_i32_0 = arith.constant 0 : i32
    return %arg0, %c0_i32 : i32, i32
  }
  func.func @transform_1(%arg0: i32) -> (i32, i32) {
    %c0_i32 = arith.constant 0 : i32
    %c0_i32_0 = arith.constant 0 : i32
    %c0_i32_1 = arith.constant 0 : i32
    return %c0_i32, %c0_i32_0 : i32, i32
  }
  func.func @transform_2(%arg0: i32) -> (i32, i32) {
    %c0_i32 = arith.constant 0 : i32
    %c0_i32_0 = arith.constant 0 : i32
    %c0_i32_1 = arith.constant 0 : i32
    return %c0_i32, %c0_i32_0 : i32, i32
  }
  func.func @transform_3(%arg0: i32) -> (i32, i32) {
    %c0_i32 = arith.constant 0 : i32
    %c0_i32_0 = arith.constant 0 : i32
    %c0_i32_1 = arith.constant 0 : i32
    return %c0_i32, %c0_i32_0 : i32, i32
  }
  func.func @transform_4(%arg0: i32) -> (i32, i32) {
    %c0_i32 = arith.constant 0 : i32
    %c0_i32_0 = arith.constant 0 : i32
    return %arg0, %c0_i32 : i32, i32
  }
}

</mosaic_0001>

<llo_original>
// kernel: tpu_custom_call.1
$region0: #{tpu_custom_call.1}
  #allocation0 [shape = 'u32[]', space=smem, size = 0x4, offset = 0x4, fixed_abs, tag = 'smem constant byte address 0x4 - core index']
  #allocation1 [shape = 'u32[144,128]{1,0:T(1,128)}', space=vmem, size = 0x12000, scoped, tag = 'internal scratch']
  %s0 = inlined_call_operand.hbm [shape: f32[16,32], index: 0, kind: input, shape index: {}]
  %s1 = inlined_call_operand.hbm [shape: f32[32,544], index: 1, kind: input, shape index: {}]
  %s2 = inlined_call_operand.hbm [shape: f32[896,128], index: 2, kind: input, shape index: {}]
  %s3 = inlined_call_operand.hbm [shape: f32[13,128], index: 3, kind: input, shape index: {}]
  %s4 = inlined_call_operand.hbm [shape: f32[16,160], index: 4, kind: output, shape index: {}]
  %s5 = sld [smem:[#allocation0]]
  $region65: #{tpu_custom_call.1} parent=0
    _
  %s7 = ssub.s32 1, %s5
  %s8 = scalar_select 0, %s7, %s5
  $region1: #{tpu_custom_call.1} parent=0
    #allocation2 [shape = 'u8[8192]{0}', space=vmem, size = 0x2000, scoped, tag = 'input window, operand 0']
    #allocation3 [shape = 's32[2]{0}', space=sflag, size = 0x8, scoped, tag = 'scoped memory for tpu_custom_call.1']
    #allocation4 [shape = 's32[2]{0}', space=sflag, size = 0x8, scoped, tag = 'scoped memory for tpu_custom_call.1']
    #allocation5 [shape = 'u8[81920]{0}', space=vmem, size = 0x14000, scoped, tag = 'input window, operand 1, single buffered']
    #allocation6 [shape = 's32[1]{0}', space=sflag, size = 0x4, scoped, tag = 'scoped memory for tpu_custom_call.1']
    #allocation7 [shape = 'u8[458752]{0}', space=vmem, size = 0x70000, scoped, tag = 'input window, operand 2, single buffered']
    #allocation8 [shape = 'u8[8192]{0}', space=vmem, size = 0x2000, scoped, tag = 'input window, operand 3, single buffered']
    #allocation9 [shape = 's32[1]{0}', space=sflag, size = 0x4, scoped, tag = 'scoped memory for tpu_custom_call.1']
    #allocation10 [shape = 'u8[16384]{0}', space=vmem, size = 0x4000, scoped, tag = 'output window, operand 0']
    %9 = vsyncpa [#allocation3], 0
    %s10 = scalar_lea.sflag [#allocation3], 1
    %11 = vsyncpa %s10, 0
    %12 = vsyncpa [#allocation6], 0
    %13 = vsyncpa [#allocation9], 0
    %14 = vsyncpa [#allocation4], 0
    %s15 = scalar_lea.sflag [#allocation4], 1
    %16 = vsyncpa %s15, 0
    loop: start=0, step=1, limit=4
    $region2: #{tpu_custom_call.1} parent=1 // loop_pre_header
      _
    $region3: #{tpu_custom_call.1} parent=1 // loop_header
      %s18 = sphi 0, %s22
      %p19 = scmp.ge.s32.totalorder %s18, 4
      %s28 = sphi 0, %s30
      %s31 = sphi 0, %s28
      %s32 = sphi 0, %s31
      %s48 = sphi 0, %s32
      %s52 = sphi 0, %s52
      %s54 = sphi 0, %s52
      %s55 = sphi 0, %s54
      %s69 = sphi 0, %s55
      %s73 = sphi 0, %s73
      %s75 = sphi 0, %s73
      %s76 = sphi 0, %s75
      %s90 = sphi 0, %s76
      %s94 = sphi 0, %s94
      %s96 = sphi 0, %s94
      %s97 = sphi 0, %s96
      %s111 = sphi 0, %s97
      %s117 = sphi 0, %s119
      %s120 = sphi 0, %s117
      %s121 = sphi 0, %s120
      %s137 = sphi 0, %s121
    $region4: #{tpu_custom_call.1} parent=1 // loop_header_branch
      %21 = sbr.rel (%p19) target = $region8
    $region5: #{tpu_custom_call.1} parent=1 // loop_body
      %s23 = ssub.s32 %s18, 1
      %s24 = ssub.s32 %s18, 2
      %s25 = sadd.s32 %s18, 1
      %s26 = ssub.s32 %s18, %s25
      %p27 = scmp.eq.s32.totalorder %s26, 0
      %s29 = sadd.s32 %s28, 1
      %s30 = scalar_select %p27, %s28, %s29
      %p33 = pneg %p27
      %p34 = scmp.eq.s32.totalorder %s18, 1
      %p35 = por %p33, %p34
      %p36 = scmp.ne.s32.totalorder %s28, %s31
      %p37 = scmp.eq.s32.totalorder %s18, 0
      %p38 = por %p36, %p37
      %p39 = scmp.ne.s32.totalorder %s28, %s31
      %p40 = scmp.eq.s32.totalorder %s23, 1
      %p41 = por %p39, %p40
      %p42 = scmp.ne.s32.totalorder %s31, %s32
      %p43 = scmp.eq.s32.totalorder %s23, 0
      %p44 = por %p42, %p43
      %p45 = scmp.ne.s32.totalorder %s31, %s32
      %p46 = scmp.eq.s32.totalorder %s24, 1
      %p47 = por %p45, %p46
      %p49 = scmp.ne.s32.totalorder %s32, %s48
      %p50 = scmp.eq.s32.totalorder %s24, 0
      %p51 = por %p49, %p50
      %s53 = sadd.s32 %s52, 1
      %p56 = scmp.eq.s32.totalorder %s18, 1
      %p57 = scmp.ne.s32.totalorder %s52, %s54
      %p58 = scmp.eq.s32.totalorder %s18, 0
      %p59 = por %p57, %p58
      %p60 = scmp.ne.s32.totalorder %s52, %s54
      %p61 = scmp.eq.s32.totalorder %s23, 1
      %p62 = por %p60, %p61
      %p63 = scmp.ne.s32.totalorder %s54, %s55
      %p64 = scmp.eq.s32.totalorder %s23, 0
      %p65 = por %p63, %p64
      %p66 = scmp.ne.s32.totalorder %s54, %s55
      %p67 = scmp.eq.s32.totalorder %s24, 1
      %p68 = por %p66, %p67
      %p70 = scmp.ne.s32.totalorder %s55, %s69
      %p71 = scmp.eq.s32.totalorder %s24, 0
      %p72 = por %p70, %p71
      %s74 = sadd.s32 %s73, 1
      %p77 = scmp.eq.s32.totalorder %s18, 1
      %p78 = scmp.ne.s32.totalorder %s73, %s75
      %p79 = scmp.eq.s32.totalorder %s18, 0
      %p80 = por %p78, %p79
      %p81 = scmp.ne.s32.totalorder %s73, %s75
      %p82 = scmp.eq.s32.totalorder %s23, 1
      %p83 = por %p81, %p82
      %p84 = scmp.ne.s32.totalorder %s75, %s76
      %p85 = scmp.eq.s32.totalorder %s23, 0
      %p86 = por %p84, %p85
      %p87 = scmp.ne.s32.totalorder %s75, %s76
      %p88 = scmp.eq.s32.totalorder %s24, 1
      %p89 = por %p87, %p88
      %p91 = scmp.ne.s32.totalorder %s76, %s90
      %p92 = scmp.eq.s32.totalorder %s24, 0
      %p93 = por %p91, %p92
      %s95 = sadd.s32 %s94, 1
      %p98 = scmp.eq.s32.totalorder %s18, 1
      %p99 = scmp.ne.s32.totalorder %s94, %s96
      %p100 = scmp.eq.s32.totalorder %s18, 0
      %p101 = por %p99, %p100
      %p102 = scmp.ne.s32.totalorder %s94, %s96
      %p103 = scmp.eq.s32.totalorder %s23, 1
      %p104 = por %p102, %p103
      %p105 = scmp.ne.s32.totalorder %s96, %s97
      %p106 = scmp.eq.s32.totalorder %s23, 0
      %p107 = por %p105, %p106
      %p108 = scmp.ne.s32.totalorder %s96, %s97
      %p109 = scmp.eq.s32.totalorder %s24, 1
      %p110 = por %p108, %p109
      %p112 = scmp.ne.s32.totalorder %s97, %s111
      %p113 = scmp.eq.s32.totalorder %s24, 0
      %p114 = por %p112, %p113
      %s115 = ssub.s32 %s18, %s25
      %p116 = scmp.eq.s32.totalorder %s115, 0
      %s118 = sadd.s32 %s117, 1
      %s119 = scalar_select %p116, %s117, %s118
      %p122 = pneg %p116
      %p123 = scmp.eq.s32.totalorder %s18, 1
      %p124 = por %p122, %p123
      %p125 = scmp.ne.s32.totalorder %s117, %s120
      %p126 = scmp.eq.s32.totalorder %s18, 0
      %p127 = por %p125, %p126
      %p128 = scmp.ne.s32.totalorder %s117, %s120
      %p129 = scmp.eq.s32.totalorder %s23, 1
      %p130 = por %p128, %p129
      %p131 = scmp.ne.s32.totalorder %s120, %s121
      %p132 = scmp.eq.s32.totalorder %s23, 0
      %p133 = por %p131, %p132
      %p134 = scmp.ne.s32.totalorder %s120, %s121
      %p135 = scmp.eq.s32.totalorder %s24, 1
      %p136 = por %p134, %p135
      %p138 = scmp.ne.s32.totalorder %s121, %s137
      %p139 = scmp.eq.s32.totalorder %s24, 0
      %p140 = por %p138, %p139
      %p141 = scmp.le.s32.totalorder 1, %s18
      %p142 = scmp.lt.s32.totalorder %s18, 3
      %p143 = pnand %p141, %p142
      %p144 = pneg %p143
      // Predicated region
      $region9: #{tpu_custom_call.1} parent=5 // pred_check
        _
      $region10: #{tpu_custom_call.1} parent=5 // pred_check_branch
        %146 = sbr.rel (%p143) target = $region12
      $region11: #{tpu_custom_call.1} parent=5 // pred_region
        %s147 = ssub.s32 %s18, 1
        // Predicated region
        $region13: #{tpu_custom_call.1} parent=11 // pred_check
          %p148 = pneg %p65
        $region14: #{tpu_custom_call.1} parent=11 // pred_check_branch
          %150 = sbr.rel (%p148) target = $region16
        $region15: #{tpu_custom_call.1} parent=11 // pred_region
          %s152 = ssub.s32 2560, 2560
          %153 = vsyncadd [#allocation6], %s152
          %s154 = sshll.u32 [#allocation5], 4
          %s155 = int_to_ptr.vmem [resolvable:$true] %s154
          %160 = dma.hbm_to_vmem [thread:$0]  %s1, 2560, %s155, [#allocation6], 640, 640, 40
        $region16: #{tpu_custom_call.1} parent=11 // pred_fallthru
          _
        // Predicated region
        $region17: #{tpu_custom_call.1} parent=11 // pred_check
          %p161 = pneg %p86
        $region18: #{tpu_custom_call.1} parent=11 // pred_check_branch
          %163 = sbr.rel (%p161) target = $region20
        $region19: #{tpu_custom_call.1} parent=11 // pred_region
          %s165 = ssub.s32 14336, 14336
          %166 = vsyncadd [#allocation6], %s165
          %s167 = sshll.u32 [#allocation7], 4
          %s168 = int_to_ptr.vmem [resolvable:$true] %s167
          %173 = dma.hbm_to_vmem [thread:$0]  %s2, 14336, %s168, [#allocation6], 128, 128, 8
        $region20: #{tpu_custom_call.1} parent=11 // pred_fallthru
          _
        // Predicated region
        $region21: #{tpu_custom_call.1} parent=11 // pred_check
          %p174 = pneg %p107
        $region22: #{tpu_custom_call.1} parent=11 // pred_check_branch
          %176 = sbr.rel (%p174) target = $region24
        $region23: #{tpu_custom_call.1} parent=11 // pred_region
          %s178 = ssub.s32 256, 256
          %179 = vsyncadd [#allocation9], %s178
          %s180 = sshll.u32 [#allocation8], 4
          %s181 = int_to_ptr.vmem [resolvable:$true] %s180
          %186 = dma.hbm_to_vmem [thread:$0]  %s3, 256, %s181, [#allocation9], 128, 128, 8
        $region24: #{tpu_custom_call.1} parent=11 // pred_fallthru
          _
      $region12: #{tpu_custom_call.1} parent=5 // pred_fallthru
        _
      %p187 = scmp.lt.s32.totalorder %s18, 2
      // Predicated region
      $region25: #{tpu_custom_call.1} parent=5 // pred_check
        %p188 = pneg %p187
      $region26: #{tpu_custom_call.1} parent=5 // pred_check_branch
        %190 = sbr.rel (%p188) target = $region28
      $region27: #{tpu_custom_call.1} parent=5 // pred_region
        // Predicated region
        $region29: #{tpu_custom_call.1} parent=27 // pred_check
          %p191 = pneg %p38
        $region30: #{tpu_custom_call.1} parent=27 // pred_check_branch
          %193 = sbr.rel (%p191) target = $region32
        $region31: #{tpu_custom_call.1} parent=27 // pred_region
          %s194 = sand.u32 %s28, 1
          %s195 = scalar_lea.sflag [#allocation3], %s194
          %s196 = sand.u32 %s28, 1
          %s197 = smul.addr %s196, 8
          %s198 = scalar_lea.vmem [#allocation2], %s197
          %s200 = ssub.s32 128, 128
          %201 = vsyncadd %s195, %s200
          %s202 = smul.addr %s18, 128
          %s203 = scalar_lea.hbm %s0, %s202
          %s205 = sshll.u32 %s198, 4
          %s206 = int_to_ptr.vmem [resolvable:$true] %s205
          %208 = dma.hbm_to_vmem [thread:$0]  %s203, 128, %s206, %s195
        $region32: #{tpu_custom_call.1} parent=27 // pred_fallthru
          _
      $region28: #{tpu_custom_call.1} parent=5 // pred_fallthru
        _
      %p209 = scmp.le.s32.totalorder 1, %s18
      %p210 = scmp.lt.s32.totalorder %s18, 3
      %p211 = pnand %p209, %p210
      %p212 = pneg %p211
      // Predicated region
      $region33: #{tpu_custom_call.1} parent=5 // pred_check
        _
      $region34: #{tpu_custom_call.1} parent=5 // pred_check_branch
        %214 = sbr.rel (%p211) target = $region36
      $region35: #{tpu_custom_call.1} parent=5 // pred_region
        %s215 = ssub.s32 %s18, 1
        %s216 = sand.u32 %s31, 1
        %s217 = scalar_lea.sflag [#allocation3], %s216
        %s218 = sand.u32 %s31, 1
        %s219 = smul.addr %s218, 8
        %s220 = scalar_lea.vmem [#allocation2], %s219
        // Predicated region
        $region37: #{tpu_custom_call.1} parent=35 // pred_check
          %p221 = pneg %p44
        $region38: #{tpu_custom_call.1} parent=35 // pred_check_branch
          %223 = sbr.rel (%p221) target = $region40
        $region39: #{tpu_custom_call.1} parent=35 // pred_region
          %224 = dma.done %s217, 128
        $region40: #{tpu_custom_call.1} parent=35 // pred_fallthru
          _
        // Predicated region
        $region41: #{tpu_custom_call.1} parent=35 // pred_check
          %p225 = pneg %p65
        $region42: #{tpu_custom_call.1} parent=35 // pred_check_branch
          %227 = sbr.rel (%p225) target = $region44
        $region43: #{tpu_custom_call.1} parent=35 // pred_region
          %228 = dma.done [#allocation6], 2560
        $region44: #{tpu_custom_call.1} parent=35 // pred_fallthru
          _
        // Predicated region
        $region45: #{tpu_custom_call.1} parent=35 // pred_check
          %p229 = pneg %p86
        $region46: #{tpu_custom_call.1} parent=35 // pred_check_branch
          %231 = sbr.rel (%p229) target = $region48
        $region47: #{tpu_custom_call.1} parent=35 // pred_region
          %232 = dma.done [#allocation6], 14336
        $region48: #{tpu_custom_call.1} parent=35 // pred_fallthru
          _
        // Predicated region
        $region49: #{tpu_custom_call.1} parent=35 // pred_check
          %p233 = pneg %p107
        $region50: #{tpu_custom_call.1} parent=35 // pred_check_branch
          %235 = sbr.rel (%p233) target = $region52
        $region51: #{tpu_custom_call.1} parent=35 // pred_region
          %236 = dma.done [#allocation9], 256
        $region52: #{tpu_custom_call.1} parent=35 // pred_fallthru
          _
        %s237 = sand.u32 %s31, 1
        %s238 = scalar_lea.sflag [#allocation3], %s237
        %s239 = sand.u32 %s31, 1
        %s240 = smul.addr %s239, 8
        %s241 = scalar_lea.vmem [#allocation2], %s240
        %p242 = pneg %p44
        %p243 = pneg %p41
        %p244 = pneg %p65
        %p245 = pneg %p62
        %p246 = pneg %p86
        %p247 = pneg %p83
        %p248 = pneg %p107
        %p249 = pneg %p104
        %p250 = pneg %p133
        %p251 = pneg %p130
        %s252 = sand.u32 %s120, 1
        %s253 = scalar_lea.sflag [#allocation4], %s252
        %s254 = sand.u32 %s120, 1
        %s255 = smul.addr %s254, 16
        %s256 = scalar_lea.vmem [#allocation10], %s255
        %v257 = vld [vmem:[%s220] sm:$0xff]
        %v258 = vld [vmem:[#allocation5] sm:$0xff]
        %v259 = vld [vmem:[#allocation5 + $0x8] sm:$0xff]
        %v260 = vld [vmem:[#allocation5 + $0x10] sm:$0xff]
        %v261 = vld [vmem:[#allocation5 + $0x18] sm:$0xff]
        %v262 = vld [vmem:[#allocation5 + $0x20] sm:$0xff]
        %v263 = vld [vmem:[#allocation5 + $0x28] sm:$0xff]
        %v264 = vld [vmem:[#allocation5 + $0x30] sm:$0xff]
        %v265 = vld [vmem:[#allocation5 + $0x38] sm:$0xff]
        %v266 = vld [vmem:[#allocation5 + $0x40] sm:$0xff]
        %v267 = vld [vmem:[#allocation5 + $0x48] sm:$0xff]
        %v268 = vld [vmem:[#allocation5 + $0x50] sm:$0xff]
        %v269 = vld [vmem:[#allocation5 + $0x58] sm:$0xff]
        %v270 = vld [vmem:[#allocation5 + $0x60] sm:$0xff]
        %v271 = vld [vmem:[#allocation5 + $0x68] sm:$0xff]
        %v272 = vld [vmem:[#allocation5 + $0x70] sm:$0xff]
        %v273 = vld [vmem:[#allocation5 + $0x78] sm:$0xff]
        %v274 = vld [vmem:[#allocation5 + $0x80] sm:$0xff]
        %v275 = vld [vmem:[#allocation5 + $0x88] sm:$0xff]
        %v276 = vld [vmem:[#allocation5 + $0x90] sm:$0xff]
        %v277 = vld [vmem:[#allocation5 + $0x98] sm:$0xff]
        %vm278 = vcmask 261120
        %v280 = vsel %vm278, %v257, 0
        %282 = vmatprep.subr.mxu0 %v259
        %283 = vmatpush1.msra.mxu0 %v258
        %284 = vmatprep.subr.mxu0 %v264
        %285 = vmatpush1.msra.mxu0 %v263
        %286 = vmatprep.subr.mxu0 %v269
        %287 = vmatpush1.msra.mxu0 %v268
        %288 = vmatprep.subr.mxu0 %v274
        %289 = vmatpush1.msra.mxu0 %v273
        %290 = vmatprep.subr.mxu0 0.0
        %291 = vmatpush1.msra.mxu0 0.0
        %292 = vmatprep.subr.mxu0 0.0
        %293 = vmatpush1.msra.mxu0 0.0
        %294 = vmatprep.subr.mxu0 0.0
        %295 = vmatpush1.msra.mxu0 0.0
        %296 = vmatprep.subr.mxu0 0.0
        %297 = vmatpush1.msra.mxu0 0.0
        %298 = vmatprep.subr.mxu0 0.0
        %299 = vmatpush1.msra.mxu0 0.0
        %300 = vmatprep.subr.mxu0 0.0
        %301 = vmatpush1.msra.mxu0 0.0
        %302 = vmatprep.subr.mxu0 0.0
        %303 = vmatpush1.msra.mxu0 0.0
        %304 = vmatprep.subr.mxu0 0.0
        %305 = vmatpush1.msra.mxu0 0.0
        %306 = vmatprep.subr.mxu0 0.0
        %307 = vmatpush1.msra.mxu0 0.0
        %308 = vmatprep.subr.mxu0 0.0
        %309 = vmatpush1.msra.mxu0 0.0
        %310 = vmatprep.subr.mxu0 0.0
        %311 = vmatpush1.msra.mxu0 0.0
        %312 = vmatprep.subr.mxu0 0.0
        %313 = vmatpush1.msra.mxu0 0.0
        %314 = vmatprep.subr.mxu0 0.0
        %315 = vmatpush1.msra.mxu0 0.0
        %316 = vmatprep.subr.mxu0 0.0
        %317 = vmatpush1.msra.mxu0 0.0
        %318 = vmatprep.subr.mxu0 0.0
        %319 = vmatpush1.msra.mxu0 0.0
        %320 = vmatprep.subr.mxu0 0.0
        %321 = vmatpush1.msra.mxu0 0.0
        %322 = vmatprep.subr.mxu0 0.0
        %323 = vmatpush1.msra.mxu0 0.0
        %324 = vmatprep.subr.mxu0 0.0
        %325 = vmatpush1.msra.mxu0 0.0
        %326 = vmatprep.subr.mxu0 0.0
        %327 = vmatpush1.msra.mxu0 0.0
        %328 = vmatprep.subr.mxu0 0.0
        %329 = vmatpush1.msra.mxu0 0.0
        %330 = vmatprep.subr.mxu0 0.0
        %331 = vmatpush1.msra.mxu0 0.0
        %332 = vmatprep.subr.mxu0 0.0
        %333 = vmatpush1.msra.mxu0 0.0
        %334 = vmatprep.subr.mxu0 0.0
        %335 = vmatpush1.msra.mxu0 0.0
        %336 = vmatprep.subr.mxu0 0.0
        %337 = vmatpush1.msra.mxu0 0.0
        %338 = vmatprep.subr.mxu0 0.0
        %339 = vmatpush1.msra.mxu0 0.0
        %340 = vmatprep.subr.mxu0 0.0
        %341 = vmatpush1.msra.mxu0 0.0
        %342 = vmatprep.subr.mxu0 0.0
        %343 = vmatpush1.msra.mxu0 0.0
        %344 = vmatprep.subr.mxu0 0.0
        %345 = vmatpush1.msra.mxu0 0.0
        %346 = vmatprep.mubr.f32.mxu0 0.0
        %347 = vmatmul.mubr.f32.gmra.mrb[0].mxu0 %v280
        %v348 = vpop.f32.mrb[0].mxu0
        %v349 = vadd.f32 0.0, %v348
        %v350 = vpop.f32.mrb[0].mxu0
        %v351 = vadd.f32 0.0, %v350
        %352 = vdwg.mxu0
        %353 = vmatprep.subr.mxu0 %v261
        %354 = vmatpush1.msra.mxu0 %v260
        %355 = vmatprep.subr.mxu0 %v266
        %356 = vmatpush1.msra.mxu0 %v265
        %357 = vmatprep.subr.mxu0 %v271
        %358 = vmatpush1.msra.mxu0 %v270
        %359 = vmatprep.subr.mxu0 %v276
        %360 = vmatpush1.msra.mxu0 %v275
        %361 = vmatprep.subr.mxu0 0.0
        %362 = vmatpush1.msra.mxu0 0.0
        %363 = vmatprep.subr.mxu0 0.0
        %364 = vmatpush1.msra.mxu0 0.0
        %365 = vmatprep.subr.mxu0 0.0
        %366 = vmatpush1.msra.mxu0 0.0
        %367 = vmatprep.subr.mxu0 0.0
        %368 = vmatpush1.msra.mxu0 0.0
        %369 = vmatprep.subr.mxu0 0.0
        %370 = vmatpush1.msra.mxu0 0.0
        %371 = vmatprep.subr.mxu0 0.0
        %372 = vmatpush1.msra.mxu0 0.0
        %373 = vmatprep.subr.mxu0 0.0
        %374 = vmatpush1.msra.mxu0 0.0
        %375 = vmatprep.subr.mxu0 0.0
        %376 = vmatpush1.msra.mxu0 0.0
        %377 = vmatprep.subr.mxu0 0.0
        %378 = vmatpush1.msra.mxu0 0.0
        %379 = vmatprep.subr.mxu0 0.0
        %380 = vmatpush1.msra.mxu0 0.0
        %381 = vmatprep.subr.mxu0 0.0
        %382 = vmatpush1.msra.mxu0 0.0
        %383 = vmatprep.subr.mxu0 0.0
        %384 = vmatpush1.msra.mxu0 0.0
        %385 = vmatprep.subr.mxu0 0.0
        %386 = vmatpush1.msra.mxu0 0.0
        %387 = vmatprep.subr.mxu0 0.0
        %388 = vmatpush1.msra.mxu0 0.0
        %389 = vmatprep.subr.mxu0 0.0
        %390 = vmatpush1.msra.mxu0 0.0
        %391 = vmatprep.subr.mxu0 0.0
        %392 = vmatpush1.msra.mxu0 0.0
        %393 = vmatprep.subr.mxu0 0.0
        %394 = vmatpush1.msra.mxu0 0.0
        %395 = vmatprep.subr.mxu0 0.0
        %396 = vmatpush1.msra.mxu0 0.0
        %397 = vmatprep.subr.mxu0 0.0
        %398 = vmatpush1.msra.mxu0 0.0
        %399 = vmatprep.subr.mxu0 0.0
        %400 = vmatpush1.msra.mxu0 0.0
        %401 = vmatprep.subr.mxu0 0.0
        %402 = vmatpush1.msra.mxu0 0.0
        %403 = vmatprep.subr.mxu0 0.0
        %404 = vmatpush1.msra.mxu0 0.0
        %405 = vmatprep.subr.mxu0 0.0
        %406 = vmatpush1.msra.mxu0 0.0
        %407 = vmatprep.subr.mxu0 0.0
        %408 = vmatpush1.msra.mxu0 0.0
        %409 = vmatprep.subr.mxu0 0.0
        %410 = vmatpush1.msra.mxu0 0.0
        %411 = vmatprep.subr.mxu0 0.0
        %412 = vmatpush1.msra.mxu0 0.0
        %413 = vmatprep.subr.mxu0 0.0
        %414 = vmatpush1.msra.mxu0 0.0
        %415 = vmatprep.subr.mxu0 0.0
        %416 = vmatpush1.msra.mxu0 0.0
        %417 = vmatprep.mubr.f32.mxu0 0.0
        %418 = vmatmul.mubr.f32.gmra.mrb[0].mxu0 %v280
        %v419 = vpop.f32.mrb[0].mxu0
        %v420 = vadd.f32 0.0, %v419
        %v421 = vpop.f32.mrb[0].mxu0
        %v422 = vadd.f32 0.0, %v421
        %423 = vdwg.mxu0
        %424 = vmatprep.subr.mxu0 0.0
        %425 = vmatpush1.msra.mxu0 %v262
        %426 = vmatprep.subr.mxu0 0.0
        %427 = vmatpush1.msra.mxu0 %v267
        %428 = vmatprep.subr.mxu0 0.0
        %429 = vmatpush1.msra.mxu0 %v272
        %430 = vmatprep.subr.mxu0 0.0
        %431 = vmatpush1.msra.mxu0 %v277
        %432 = vmatprep.subr.mxu0 0.0
        %433 = vmatpush1.msra.mxu0 0.0
        %434 = vmatprep.subr.mxu0 0.0
        %435 = vmatpush1.msra.mxu0 0.0
        %436 = vmatprep.subr.mxu0 0.0
        %437 = vmatpush1.msra.mxu0 0.0
        %438 = vmatprep.subr.mxu0 0.0
        %439 = vmatpush1.msra.mxu0 0.0
        %440 = vmatprep.subr.mxu0 0.0
        %441 = vmatpush1.msra.mxu0 0.0
        %442 = vmatprep.subr.mxu0 0.0
        %443 = vmatpush1.msra.mxu0 0.0
        %444 = vmatprep.subr.mxu0 0.0
        %445 = vmatpush1.msra.mxu0 0.0
        %446 = vmatprep.subr.mxu0 0.0
        %447 = vmatpush1.msra.mxu0 0.0
        %448 = vmatprep.subr.mxu0 0.0
        %449 = vmatpush1.msra.mxu0 0.0
        %450 = vmatprep.subr.mxu0 0.0
        %451 = vmatpush1.msra.mxu0 0.0
        %452 = vmatprep.subr.mxu0 0.0
        %453 = vmatpush1.msra.mxu0 0.0
        %454 = vmatprep.subr.mxu0 0.0
        %455 = vmatpush1.msra.mxu0 0.0
        %456 = vmatprep.subr.mxu0 0.0
        %457 = vmatpush1.msra.mxu0 0.0
        %458 = vmatprep.subr.mxu0 0.0
        %459 = vmatpush1.msra.mxu0 0.0
        %460 = vmatprep.subr.mxu0 0.0
        %461 = vmatpush1.msra.mxu0 0.0
        %462 = vmatprep.subr.mxu0 0.0
        %463 = vmatpush1.msra.mxu0 0.0
        %464 = vmatprep.subr.mxu0 0.0
        %465 = vmatpush1.msra.mxu0 0.0
        %466 = vmatprep.subr.mxu0 0.0
        %467 = vmatpush1.msra.mxu0 0.0
        %468 = vmatprep.subr.mxu0 0.0
        %469 = vmatpush1.msra.mxu0 0.0
        %470 = vmatprep.subr.mxu0 0.0
        %471 = vmatpush1.msra.mxu0 0.0
        %472 = vmatprep.subr.mxu0 0.0
        %473 = vmatpush1.msra.mxu0 0.0
        %474 = vmatprep.subr.mxu0 0.0
        %475 = vmatpush1.msra.mxu0 0.0
        %476 = vmatprep.subr.mxu0 0.0
        %477 = vmatpush1.msra.mxu0 0.0
        %478 = vmatprep.subr.mxu0 0.0
        %479 = vmatpush1.msra.mxu0 0.0
        %480 = vmatprep.subr.mxu0 0.0
        %481 = vmatpush1.msra.mxu0 0.0
        %482 = vmatprep.subr.mxu0 0.0
        %483 = vmatpush1.msra.mxu0 0.0
        %484 = vmatprep.subr.mxu0 0.0
        %485 = vmatpush1.msra.mxu0 0.0
        %486 = vmatprep.subr.mxu0 0.0
        %487 = vmatpush1.msra.mxu0 0.0
        %488 = vmatprep.mubr.f32.mxu0 0.0
        %489 = vmatmul.mubr.f32.gmra.mrb[0].mxu0 %v280
        %v490 = vpop.f32.mrb[0].mxu0
        %v491 = vadd.f32 0.0, %v490
        %v492 = vpop.f32.mrb[0].mxu0
        %493 = vdwg.mxu0
        %v494 = vld [vmem:[#allocation8] sm:$0xff]
        %v495 = vld [vmem:[#allocation8 + $0x8] sm:$0x1f]
        %v496 = vlaneseq
        %v497 = vshrl.u32 %v496, 7
        %v498 = vsub.s32 4, %v497
        %v499 = vrot.slane %v495, %v498
        %v500 = vadd.f32 %v491, %v499
        %v501 = vxor.u32 %v500, 2147483648
        %v502 = vmul.f32 %v501, 1.442695
        %v503 = vpow.pop %v502
        %v504 = vadd.f32 %v503, 1.0
        %v505 = vrcp.pop %v504
        %v506 = vmul.f32 1.0, %v505
        %507 = vst.msk [vmem:[%s256] sm:$0xff] %vm278, %v506
        %v508 = vld [vmem:[#allocation7] sm:$0xff]
        %v509 = vld [vmem:[#allocation7 + $0x8] sm:$0xff]
        %v510 = vld [vmem:[#allocation7 + $0x10] sm:$0xff]
        %v511 = vld [vmem:[#allocation7 + $0x18] sm:$0xff]
        %v512 = vld [vmem:[#allocation7 + $0x20] sm:$0xff]
        %v513 = vld [vmem:[#allocation7 + $0x28] sm:$0xff]
        %v514 = vld [vmem:[#allocation7 + $0x30] sm:$0xff]
        %v515 = vld [vmem:[#allocation7 + $0x38] sm:$0xff]
        %v516 = vld [vmem:[#allocation7 + $0x40] sm:$0xff]
        %v517 = vld [vmem:[#allocation7 + $0x48] sm:$0xff]
        %v518 = vld [vmem:[#allocation7 + $0x50] sm:$0xff]
        %v519 = vld [vmem:[#allocation7 + $0x58] sm:$0xff]
        %v520 = vld [vmem:[#allocation7 + $0x60] sm:$0xff]
        %v521 = vld [vmem:[#allocation7 + $0x68] sm:$0xff]
        %v522 = vld [vmem:[#allocation7 + $0x70] sm:$0xff]
        %v523 = vld [vmem:[#allocation7 + $0x78] sm:$0xff]
        %v524 = vld [vmem:[#allocation7 + $0x80] sm:$0xff]
        %v525 = vld [vmem:[#allocation7 + $0x88] sm:$0xff]
        %v526 = vld [vmem:[#allocation7 + $0x90] sm:$0xff]
        %v527 = vld [vmem:[#allocation7 + $0x98] sm:$0xff]
        %v528 = vld [vmem:[#allocation7 + $0xa0] sm:$0xff]
        %v529 = vld [vmem:[#allocation7 + $0xa8] sm:$0xff]
        %v530 = vld [vmem:[#allocation7 + $0xb0] sm:$0xff]
        %v531 = vld [vmem:[#allocation7 + $0xb8] sm:$0xff]
        %v532 = vld [vmem:[#allocation7 + $0xc0] sm:$0xff]
        %v533 = vld [vmem:[#allocation7 + $0xc8] sm:$0xff]
        %v534 = vld [vmem:[#allocation7 + $0xd0] sm:$0xff]
        %v535 = vld [vmem:[#allocation7 + $0xd8] sm:$0xff]
        %v537 = vsel %vm278, %v506, 0
        %539 = vmatprep.subr.mxu0 0.0
        %540 = vmatpush1.msra.mxu0 %v508
        %541 = vmatprep.subr.mxu0 0.0
        %542 = vmatpush1.msra.mxu0 %v509
        %543 = vmatprep.subr.mxu0 0.0
        %544 = vmatpush1.msra.mxu0 %v510
        %545 = vmatprep.subr.mxu0 0.0
        %546 = vmatpush1.msra.mxu0 %v511
        %547 = vmatprep.subr.mxu0 0.0
        %548 = vmatpush1.msra.mxu0 0.0
        %549 = vmatprep.subr.mxu0 0.0
        %550 = vmatpush1.msra.mxu0 0.0
        %551 = vmatprep.subr.mxu0 0.0
        %552 = vmatpush1.msra.mxu0 0.0
        %553 = vmatprep.subr.mxu0 0.0
        %554 = vmatpush1.msra.mxu0 0.0
        %555 = vmatprep.subr.mxu0 0.0
        %556 = vmatpush1.msra.mxu0 0.0
        %557 = vmatprep.subr.mxu0 0.0
        %558 = vmatpush1.msra.mxu0 0.0
        %559 = vmatprep.subr.mxu0 0.0
        %560 = vmatpush1.msra.mxu0 0.0
        %561 = vmatprep.subr.mxu0 0.0
        %562 = vmatpush1.msra.mxu0 0.0
        %563 = vmatprep.subr.mxu0 0.0
        %564 = vmatpush1.msra.mxu0 0.0
        %565 = vmatprep.subr.mxu0 0.0
        %566 = vmatpush1.msra.mxu0 0.0
        %567 = vmatprep.subr.mxu0 0.0
        %568 = vmatpush1.msra.mxu0 0.0
        %569 = vmatprep.subr.mxu0 0.0
        %570 = vmatpush1.msra.mxu0 0.0
        %571 = vmatprep.subr.mxu0 0.0
        %572 = vmatpush1.msra.mxu0 0.0
        %573 = vmatprep.subr.mxu0 0.0
        %574 = vmatpush1.msra.mxu0 0.0
        %575 = vmatprep.subr.mxu0 0.0
        %576 = vmatpush1.msra.mxu0 0.0
        %577 = vmatprep.subr.mxu0 0.0
        %578 = vmatpush1.msra.mxu0 0.0
        %579 = vmatprep.subr.mxu0 0.0
        %580 = vmatpush1.msra.mxu0 0.0
        %581 = vmatprep.subr.mxu0 0.0
        %582 = vmatpush1.msra.mxu0 0.0
        %583 = vmatprep.subr.mxu0 0.0
        %584 = vmatpush1.msra.mxu0 0.0
        %585 = vmatprep.subr.mxu0 0.0
        %586 = vmatpush1.msra.mxu0 0.0
        %587 = vmatprep.subr.mxu0 0.0
        %588 = vmatpush1.msra.mxu0 0.0
        %589 = vmatprep.subr.mxu0 0.0
        %590 = vmatpush1.msra.mxu0 0.0
        %591 = vmatprep.subr.mxu0 0.0
        %592 = vmatpush1.msra.mxu0 0.0
        %593 = vmatprep.subr.mxu0 0.0
        %594 = vmatpush1.msra.mxu0 0.0
        %595 = vmatprep.subr.mxu0 0.0
        %596 = vmatpush1.msra.mxu0 0.0
        %597 = vmatprep.subr.mxu0 0.0
        %598 = vmatpush1.msra.mxu0 0.0
        %599 = vmatprep.subr.mxu0 0.0
        %600 = vmatpush1.msra.mxu0 0.0
        %601 = vmatprep.subr.mxu0 0.0
        %602 = vmatpush1.msra.mxu0 0.0
        %603 = vmatprep.mubr.f32.mxu0 0.0
        %604 = vmatmul.mubr.f32.gmra.mrb[0].mxu0 %v537
        %v605 = vpop.f32.mrb[0].mxu0
        %v606 = vadd.f32 %v349, %v605
        %v607 = vpop.f32.mrb[0].mxu0
        %608 = vdwg.mxu0
        %v609 = vlaneseq
        %v610 = vshrl.u32 %v609, 7
        %v611 = vsub.s32 0, %v610
        %v612 = vrot.slane %v494, %v611
        %v613 = vadd.f32 %v606, %v612
        %vm614 = vcmp.ge.f32.partialorder %v613, 0.0
        %v615 = vmul.f32 %v613, 0.01
        %v616 = vsel %vm614, %v613, %v615
        %v617 = vlaneseq
        %v618 = vshrl.u32 %v617, 7
        %v619 = vsub.s32 1, %v618
        %v620 = vrot.slane %v494, %v619
        %621 = vmatprep.subr.mxu0 0.0
        %622 = vmatpush1.msra.mxu0 %v512
        %623 = vmatprep.subr.mxu0 0.0
        %624 = vmatpush1.msra.mxu0 %v513
        %625 = vmatprep.subr.mxu0 0.0
        %626 = vmatpush1.msra.mxu0 %v514
        %627 = vmatprep.subr.mxu0 0.0
        %628 = vmatpush1.msra.mxu0 %v515
        %629 = vmatprep.subr.mxu0 0.0
        %630 = vmatpush1.msra.mxu0 %v516
        %631 = vmatprep.subr.mxu0 0.0
        %632 = vmatpush1.msra.mxu0 %v517
        %633 = vmatprep.subr.mxu0 0.0
        %634 = vmatpush1.msra.mxu0 %v518
        %635 = vmatprep.subr.mxu0 0.0
        %636 = vmatpush1.msra.mxu0 %v519
        %637 = vmatprep.subr.mxu0 0.0
        %638 = vmatpush1.msra.mxu0 %v520
        %639 = vmatprep.subr.mxu0 0.0
        %640 = vmatpush1.msra.mxu0 %v521
        %641 = vmatprep.subr.mxu0 0.0
        %642 = vmatpush1.msra.mxu0 %v522
        %643 = vmatprep.subr.mxu0 0.0
        %644 = vmatpush1.msra.mxu0 %v523
        %645 = vmatprep.subr.mxu0 0.0
        %646 = vmatpush1.msra.mxu0 %v524
        %647 = vmatprep.subr.mxu0 0.0
        %648 = vmatpush1.msra.mxu0 %v525
        %649 = vmatprep.subr.mxu0 0.0
        %650 = vmatpush1.msra.mxu0 %v526
        %651 = vmatprep.subr.mxu0 0.0
        %652 = vmatpush1.msra.mxu0 %v527
        %653 = vmatprep.subr.mxu0 0.0
        %654 = vmatpush1.msra.mxu0 0.0
        %655 = vmatprep.subr.mxu0 0.0
        %656 = vmatpush1.msra.mxu0 0.0
        %657 = vmatprep.subr.mxu0 0.0
        %658 = vmatpush1.msra.mxu0 0.0
        %659 = vmatprep.subr.mxu0 0.0
        %660 = vmatpush1.msra.mxu0 0.0
        %661 = vmatprep.subr.mxu0 0.0
        %662 = vmatpush1.msra.mxu0 0.0
        %663 = vmatprep.subr.mxu0 0.0
        %664 = vmatpush1.msra.mxu0 0.0
        %665 = vmatprep.subr.mxu0 0.0
        %666 = vmatpush1.msra.mxu0 0.0
        %667 = vmatprep.subr.mxu0 0.0
        %668 = vmatpush1.msra.mxu0 0.0
        %669 = vmatprep.subr.mxu0 0.0
        %670 = vmatpush1.msra.mxu0 0.0
        %671 = vmatprep.subr.mxu0 0.0
        %672 = vmatpush1.msra.mxu0 0.0
        %673 = vmatprep.subr.mxu0 0.0
        %674 = vmatpush1.msra.mxu0 0.0
        %675 = vmatprep.subr.mxu0 0.0
        %676 = vmatpush1.msra.mxu0 0.0
        %677 = vmatprep.subr.mxu0 0.0
        %678 = vmatpush1.msra.mxu0 0.0
        %679 = vmatprep.subr.mxu0 0.0
        %680 = vmatpush1.msra.mxu0 0.0
        %681 = vmatprep.subr.mxu0 0.0
        %682 = vmatpush1.msra.mxu0 0.0
        %683 = vmatprep.subr.mxu0 0.0
        %684 = vmatpush1.msra.mxu0 0.0
        %685 = vmatprep.mubr.f32.mxu0 0.0
        %686 = vmatmul.mubr.f32.gmra.mrb[0].mxu0 %v616
        %v687 = vpop.f32.mrb[0].mxu0
        %v688 = vadd.f32 %v620, %v687
        %v689 = vpop.f32.mrb[0].mxu0
        %690 = vdwg.mxu0
        %vm691 = vcmp.ge.f32.partialorder %v688, 0.0
        %v692 = vmul.f32 %v688, 0.01
        %v693 = vsel %vm691, %v688, %v692
        %v694 = vlaneseq
        %v695 = vshrl.u32 %v694, 7
        %v696 = vsub.s32 2, %v695
        %v697 = vrot.slane %v494, %v696
        %vm698 = vcmask 523264
        %v700 = vsel %vm698, %v693, 0
        %702 = vmatprep.subr.mxu0 0.0
        %703 = vmatpush1.msra.mxu0 %v528
        %704 = vmatprep.subr.mxu0 0.0
        %705 = vmatpush1.msra.mxu0 %v529
        %706 = vmatprep.subr.mxu0 0.0
        %707 = vmatpush1.msra.mxu0 %v530
        %708 = vmatprep.subr.mxu0 0.0
        %709 = vmatpush1.msra.mxu0 %v531
        %710 = vmatprep.subr.mxu0 0.0
        %711 = vmatpush1.msra.mxu0 %v532
        %712 = vmatprep.subr.mxu0 0.0
        %713 = vmatpush1.msra.mxu0 %v533
        %714 = vmatprep.subr.mxu0 0.0
        %715 = vmatpush1.msra.mxu0 %v534
        %716 = vmatprep.subr.mxu0 0.0
        %717 = vmatpush1.msra.mxu0 %v535
        %718 = vmatprep.subr.mxu0 0.0
        %719 = vmatpush1.msra.mxu0 0.0
        %720 = vmatprep.subr.mxu0 0.0
        %721 = vmatpush1.msra.mxu0 0.0
        %722 = vmatprep.subr.mxu0 0.0
        %723 = vmatpush1.msra.mxu0 0.0
        %724 = vmatprep.subr.mxu0 0.0
        %725 = vmatpush1.msra.mxu0 0.0
        %726 = vmatprep.subr.mxu0 0.0
        %727 = vmatpush1.msra.mxu0 0.0
        %728 = vmatprep.subr.mxu0 0.0
        %729 = vmatpush1.msra.mxu0 0.0
        %730 = vmatprep.subr.mxu0 0.0
        %731 = vmatpush1.msra.mxu0 0.0
        %732 = vmatprep.subr.mxu0 0.0
        %733 = vmatpush1.msra.mxu0 0.0
        %734 = vmatprep.subr.mxu0 0.0
        %735 = vmatpush1.msra.mxu0 0.0
        %736 = vmatprep.subr.mxu0 0.0
        %737 = vmatpush1.msra.mxu0 0.0
        %738 = vmatprep.subr.mxu0 0.0
        %739 = vmatpush1.msra.mxu0 0.0
        %740 = vmatprep.subr.mxu0 0.0
        %741 = vmatpush1.msra.mxu0 0.0
        %742 = vmatprep.subr.mxu0 0.0
        %743 = vmatpush1.msra.mxu0 0.0
        %744 = vmatprep.subr.mxu0 0.0
        %745 = vmatpush1.msra.mxu0 0.0
        %746 = vmatprep.subr.mxu0 0.0
        %747 = vmatpush1.msra.mxu0 0.0
        %748 = vmatprep.subr.mxu0 0.0
        %749 = vmatpush1.msra.mxu0 0.0
        %750 = vmatprep.subr.mxu0 0.0
        %751 = vmatpush1.msra.mxu0 0.0
        %752 = vmatprep.subr.mxu0 0.0
        %753 = vmatpush1.msra.mxu0 0.0
        %754 = vmatprep.subr.mxu0 0.0
        %755 = vmatpush1.msra.mxu0 0.0
        %756 = vmatprep.subr.mxu0 0.0
        %757 = vmatpush1.msra.mxu0 0.0
        %758 = vmatprep.subr.mxu0 0.0
        %759 = vmatpush1.msra.mxu0 0.0
        %760 = vmatprep.subr.mxu0 0.0
        %761 = vmatpush1.msra.mxu0 0.0
        %762 = vmatprep.subr.mxu0 0.0
        %763 = vmatpush1.msra.mxu0 0.0
        %764 = vmatprep.subr.mxu0 0.0
        %765 = vmatpush1.msra.mxu0 0.0
        %766 = vmatprep.mubr.f32.mxu0 0.0
        %767 = vmatmul.mubr.f32.gmra.mrb[0].mxu0 %v700
        %v768 = vpop.f32.mrb[0].mxu0
        %v769 = vadd.f32 %v697, %v768
        %v770 = vpop.f32.mrb[0].mxu0
        %771 = vdwg.mxu0
        %v772 = vxor.u32 %v769, 2147483648
        %v773 = vmul.f32 %v772, 1.442695
        %v774 = vpow.pop %v773
        %v775 = vadd.f32 %v774, 1.0
        %v776 = vrcp.pop %v775
        %v777 = vmul.f32 1.0, %v776
        %779 = vrot.lane.b32.xlu0 %v777, 32
        %v780 = vpop.permute.xlu0 %779
        %vm782 = vcmask 523520
        %783 = vst.msk [vmem:[%s256] sm:$0xff] %vm782, %v780
        %v784 = vld [vmem:[#allocation7 + $0xe0] sm:$0xff]
        %v785 = vld [vmem:[#allocation7 + $0xe8] sm:$0xff]
        %v786 = vld [vmem:[#allocation7 + $0xf0] sm:$0xff]
        %v787 = vld [vmem:[#allocation7 + $0xf8] sm:$0xff]
        %v788 = vld [vmem:[#allocation7 + $0x100] sm:$0xff]
        %v789 = vld [vmem:[#allocation7 + $0x108] sm:$0xff]
        %v790 = vld [vmem:[#allocation7 + $0x110] sm:$0xff]
        %v791 = vld [vmem:[#allocation7 + $0x118] sm:$0xff]
        %v792 = vld [vmem:[#allocation7 + $0x120] sm:$0xff]
        %v793 = vld [vmem:[#allocation7 + $0x128] sm:$0xff]
        %v794 = vld [vmem:[#allocation7 + $0x130] sm:$0xff]
        %v795 = vld [vmem:[#allocation7 + $0x138] sm:$0xff]
        %v796 = vld [vmem:[#allocation7 + $0x140] sm:$0xff]
        %v797 = vld [vmem:[#allocation7 + $0x148] sm:$0xff]
        %v798 = vld [vmem:[#allocation7 + $0x150] sm:$0xff]
        %v799 = vld [vmem:[#allocation7 + $0x158] sm:$0xff]
        %v800 = vld [vmem:[#allocation7 + $0x160] sm:$0xff]
        %v801 = vld [vmem:[#allocation7 + $0x168] sm:$0xff]
        %v802 = vld [vmem:[#allocation7 + $0x170] sm:$0xff]
        %v803 = vld [vmem:[#allocation7 + $0x178] sm:$0xff]
        %v804 = vld [vmem:[#allocation7 + $0x180] sm:$0xff]
        %v805 = vld [vmem:[#allocation7 + $0x188] sm:$0xff]
        %v806 = vld [vmem:[#allocation7 + $0x190] sm:$0xff]
        %v807 = vld [vmem:[#allocation7 + $0x198] sm:$0xff]
        %v808 = vld [vmem:[#allocation7 + $0x1a0] sm:$0xff]
        %v809 = vld [vmem:[#allocation7 + $0x1a8] sm:$0xff]
        %v810 = vld [vmem:[#allocation7 + $0x1b0] sm:$0xff]
        %v811 = vld [vmem:[#allocation7 + $0x1b8] sm:$0xff]
        %v812 = vsel %vm278, %v777, 0
        %814 = vmatprep.subr.mxu0 0.0
        %815 = vmatpush1.msra.mxu0 %v784
        %816 = vmatprep.subr.mxu0 0.0
        %817 = vmatpush1.msra.mxu0 %v785
        %818 = vmatprep.subr.mxu0 0.0
        %819 = vmatpush1.msra.mxu0 %v786
        %820 = vmatprep.subr.mxu0 0.0
        %821 = vmatpush1.msra.mxu0 %v787
        %822 = vmatprep.subr.mxu0 0.0
        %823 = vmatpush1.msra.mxu0 0.0
        %824 = vmatprep.subr.mxu0 0.0
        %825 = vmatpush1.msra.mxu0 0.0
        %826 = vmatprep.subr.mxu0 0.0
        %827 = vmatpush1.msra.mxu0 0.0
        %828 = vmatprep.subr.mxu0 0.0
        %829 = vmatpush1.msra.mxu0 0.0
        %830 = vmatprep.subr.mxu0 0.0
        %831 = vmatpush1.msra.mxu0 0.0
        %832 = vmatprep.subr.mxu0 0.0
        %833 = vmatpush1.msra.mxu0 0.0
        %834 = vmatprep.subr.mxu0 0.0
        %835 = vmatpush1.msra.mxu0 0.0
        %836 = vmatprep.subr.mxu0 0.0
        %837 = vmatpush1.msra.mxu0 0.0
        %838 = vmatprep.subr.mxu0 0.0
        %839 = vmatpush1.msra.mxu0 0.0
        %840 = vmatprep.subr.mxu0 0.0
        %841 = vmatpush1.msra.mxu0 0.0
        %842 = vmatprep.subr.mxu0 0.0
        %843 = vmatpush1.msra.mxu0 0.0
        %844 = vmatprep.subr.mxu0 0.0
        %845 = vmatpush1.msra.mxu0 0.0
        %846 = vmatprep.subr.mxu0 0.0
        %847 = vmatpush1.msra.mxu0 0.0
        %848 = vmatprep.subr.mxu0 0.0
        %849 = vmatpush1.msra.mxu0 0.0
        %850 = vmatprep.subr.mxu0 0.0
        %851 = vmatpush1.msra.mxu0 0.0
        %852 = vmatprep.subr.mxu0 0.0
        %853 = vmatpush1.msra.mxu0 0.0
        %854 = vmatprep.subr.mxu0 0.0
        %855 = vmatpush1.msra.mxu0 0.0
        %856 = vmatprep.subr.mxu0 0.0
        %857 = vmatpush1.msra.mxu0 0.0
        %858 = vmatprep.subr.mxu0 0.0
        %859 = vmatpush1.msra.mxu0 0.0
        %860 = vmatprep.subr.mxu0 0.0
        %861 = vmatpush1.msra.mxu0 0.0
        %862 = vmatprep.subr.mxu0 0.0
        %863 = vmatpush1.msra.mxu0 0.0
        %864 = vmatprep.subr.mxu0 0.0
        %865 = vmatpush1.msra.mxu0 0.0
        %866 = vmatprep.subr.mxu0 0.0
        %867 = vmatpush1.msra.mxu0 0.0
        %868 = vmatprep.subr.mxu0 0.0
        %869 = vmatpush1.msra.mxu0 0.0
        %870 = vmatprep.subr.mxu0 0.0
        %871 = vmatpush1.msra.mxu0 0.0
        %872 = vmatprep.subr.mxu0 0.0
        %873 = vmatpush1.msra.mxu0 0.0
        %874 = vmatprep.subr.mxu0 0.0
        %875 = vmatpush1.msra.mxu0 0.0
        %876 = vmatprep.subr.mxu0 0.0
        %877 = vmatpush1.msra.mxu0 0.0
        %878 = vmatprep.mubr.f32.mxu0 0.0
        %879 = vmatmul.mubr.f32.gmra.mrb[0].mxu0 %v812
        %v880 = vpop.f32.mrb[0].mxu0
        %v881 = vadd.f32 %v351, %v880
        %v882 = vpop.f32.mrb[0].mxu0
        %883 = vdwg.mxu0
        %v884 = vlaneseq
        %v885 = vshrl.u32 %v884, 7
        %v886 = vsub.s32 3, %v885
        %v887 = vrot.slane %v494, %v886
        %v888 = vadd.f32 %v881, %v887
        %vm889 = vcmp.ge.f32.partialorder %v888, 0.0
        %v890 = vmul.f32 %v888, 0.01
        %v891 = vsel %vm889, %v888, %v890
        %v892 = vlaneseq
        %v893 = vshrl.u32 %v892, 7
        %v894 = vsub.s32 4, %v893
        %v895 = vrot.slane %v494, %v894
        %896 = vmatprep.subr.mxu0 0.0
        %897 = vmatpush1.msra.mxu0 %v788
        %898 = vmatprep.subr.mxu0 0.0
        %899 = vmatpush1.msra.mxu0 %v789
        %900 = vmatprep.subr.mxu0 0.0
        %901 = vmatpush1.msra.mxu0 %v790
        %902 = vmatprep.subr.mxu0 0.0
        %903 = vmatpush1.msra.mxu0 %v791
        %904 = vmatprep.subr.mxu0 0.0
        %905 = vmatpush1.msra.mxu0 %v792
        %906 = vmatprep.subr.mxu0 0.0
        %907 = vmatpush1.msra.mxu0 %v793
        %908 = vmatprep.subr.mxu0 0.0
        %909 = vmatpush1.msra.mxu0 %v794
        %910 = vmatprep.subr.mxu0 0.0
        %911 = vmatpush1.msra.mxu0 %v795
        %912 = vmatprep.subr.mxu0 0.0
        %913 = vmatpush1.msra.mxu0 %v796
        %914 = vmatprep.subr.mxu0 0.0
        %915 = vmatpush1.msra.mxu0 %v797
        %916 = vmatprep.subr.mxu0 0.0
        %917 = vmatpush1.msra.mxu0 %v798
        %918 = vmatprep.subr.mxu0 0.0
        %919 = vmatpush1.msra.mxu0 %v799
        %920 = vmatprep.subr.mxu0 0.0
        %921 = vmatpush1.msra.mxu0 %v800
        %922 = vmatprep.subr.mxu0 0.0
        %923 = vmatpush1.msra.mxu0 %v801
        %924 = vmatprep.subr.mxu0 0.0
        %925 = vmatpush1.msra.mxu0 %v802
        %926 = vmatprep.subr.mxu0 0.0
        %927 = vmatpush1.msra.mxu0 %v803
        %928 = vmatprep.subr.mxu0 0.0
        %929 = vmatpush1.msra.mxu0 0.0
        %930 = vmatprep.subr.mxu0 0.0
        %931 = vmatpush1.msra.mxu0 0.0
        %932 = vmatprep.subr.mxu0 0.0
        %933 = vmatpush1.msra.mxu0 0.0
        %934 = vmatprep.subr.mxu0 0.0
        %935 = vmatpush1.msra.mxu0 0.0
        %936 = vmatprep.subr.mxu0 0.0
        %937 = vmatpush1.msra.mxu0 0.0
        %938 = vmatprep.subr.mxu0 0.0
        %939 = vmatpush1.msra.mxu0 0.0
        %940 = vmatprep.subr.mxu0 0.0
        %941 = vmatpush1.msra.mxu0 0.0
        %942 = vmatprep.subr.mxu0 0.0
        %943 = vmatpush1.msra.mxu0 0.0
        %944 = vmatprep.subr.mxu0 0.0
        %945 = vmatpush1.msra.mxu0 0.0
        %946 = vmatprep.subr.mxu0 0.0
        %947 = vmatpush1.msra.mxu0 0.0
        %948 = vmatprep.subr.mxu0 0.0
        %949 = vmatpush1.msra.mxu0 0.0
        %950 = vmatprep.subr.mxu0 0.0
        %951 = vmatpush1.msra.mxu0 0.0
        %952 = vmatprep.subr.mxu0 0.0
        %953 = vmatpush1.msra.mxu0 0.0
        %954 = vmatprep.subr.mxu0 0.0
        %955 = vmatpush1.msra.mxu0 0.0
        %956 = vmatprep.subr.mxu0 0.0
        %957 = vmatpush1.msra.mxu0 0.0
        %958 = vmatprep.subr.mxu0 0.0
        %959 = vmatpush1.msra.mxu0 0.0
        %960 = vmatprep.mubr.f32.mxu0 0.0
        %961 = vmatmul.mubr.f32.gmra.mrb[0].mxu0 %v891
        %v962 = vpop.f32.mrb[0].mxu0
        %v963 = vadd.f32 %v895, %v962
        %v964 = vpop.f32.mrb[0].mxu0
        %965 = vdwg.mxu0
        %vm966 = vcmp.ge.f32.partialorder %v963, 0.0
        %v967 = vmul.f32 %v963, 0.01
        %v968 = vsel %vm966, %v963, %v967
        %v969 = vlaneseq
        %v970 = vshrl.u32 %v969, 7
        %v971 = vsub.s32 5, %v970
        %v972 = vrot.slane %v494, %v971
        %v974 = vsel %vm698, %v968, 0
        %976 = vmatprep.subr.mxu0 0.0
        %977 = vmatpush1.msra.mxu0 %v804
        %978 = vmatprep.subr.mxu0 0.0
        %979 = vmatpush1.msra.mxu0 %v805
        %980 = vmatprep.subr.mxu0 0.0
        %981 = vmatpush1.msra.mxu0 %v806
        %982 = vmatprep.subr.mxu0 0.0
        %983 = vmatpush1.msra.mxu0 %v807
        %984 = vmatprep.subr.mxu0 0.0
        %985 = vmatpush1.msra.mxu0 %v808
        %986 = vmatprep.subr.mxu0 0.0
        %987 = vmatpush1.msra.mxu0 %v809
        %988 = vmatprep.subr.mxu0 0.0
        %989 = vmatpush1.msra.mxu0 %v810
        %990 = vmatprep.subr.mxu0 0.0
        %991 = vmatpush1.msra.mxu0 %v811
        %992 = vmatprep.subr.mxu0 0.0
        %993 = vmatpush1.msra.mxu0 0.0
        %994 = vmatprep.subr.mxu0 0.0
        %995 = vmatpush1.msra.mxu0 0.0
        %996 = vmatprep.subr.mxu0 0.0
        %997 = vmatpush1.msra.mxu0 0.0
        %998 = vmatprep.subr.mxu0 0.0
        %999 = vmatpush1.msra.mxu0 0.0
        %1000 = vmatprep.subr.mxu0 0.0
        %1001 = vmatpush1.msra.mxu0 0.0
        %1002 = vmatprep.subr.mxu0 0.0
        %1003 = vmatpush1.msra.mxu0 0.0
        %1004 = vmatprep.subr.mxu0 0.0
        %1005 = vmatpush1.msra.mxu0 0.0
        %1006 = vmatprep.subr.mxu0 0.0
        %1007 = vmatpush1.msra.mxu0 0.0
        %1008 = vmatprep.subr.mxu0 0.0
        %1009 = vmatpush1.msra.mxu0 0.0
        %1010 = vmatprep.subr.mxu0 0.0
        %1011 = vmatpush1.msra.mxu0 0.0
        %1012 = vmatprep.subr.mxu0 0.0
        %1013 = vmatpush1.msra.mxu0 0.0
        %1014 = vmatprep.subr.mxu0 0.0
        %1015 = vmatpush1.msra.mxu0 0.0
        %1016 = vmatprep.subr.mxu0 0.0
        %1017 = vmatpush1.msra.mxu0 0.0
        %1018 = vmatprep.subr.mxu0 0.0
        %1019 = vmatpush1.msra.mxu0 0.0
        %1020 = vmatprep.subr.mxu0 0.0
        %1021 = vmatpush1.msra.mxu0 0.0
        %1022 = vmatprep.subr.mxu0 0.0
        %1023 = vmatpush1.msra.mxu0 0.0
        %1024 = vmatprep.subr.mxu0 0.0
        %1025 = vmatpush1.msra.mxu0 0.0
        %1026 = vmatprep.subr.mxu0 0.0
        %1027 = vmatpush1.msra.mxu0 0.0
        %1028 = vmatprep.subr.mxu0 0.0
        %1029 = vmatpush1.msra.mxu0 0.0
        %1030 = vmatprep.subr.mxu0 0.0
        %1031 = vmatpush1.msra.mxu0 0.0
        %1032 = vmatprep.subr.mxu0 0.0
        %1033 = vmatpush1.msra.mxu0 0.0
        %1034 = vmatprep.subr.mxu0 0.0
        %1035 = vmatpush1.msra.mxu0 0.0
        %1036 = vmatprep.subr.mxu0 0.0
        %1037 = vmatpush1.msra.mxu0 0.0
        %1038 = vmatprep.subr.mxu0 0.0
        %1039 = vmatpush1.msra.mxu0 0.0
        %1040 = vmatprep.mubr.f32.mxu0 0.0
        %1041 = vmatmul.mubr.f32.gmra.mrb[0].mxu0 %v974
        %v1042 = vpop.f32.mrb[0].mxu0
        %v1043 = vadd.f32 %v972, %v1042
        %v1044 = vpop.f32.mrb[0].mxu0
        %1045 = vdwg.mxu0
        %v1046 = vxor.u32 %v1043, 2147483648
        %v1047 = vmul.f32 %v1046, 1.442695
        %v1048 = vpow.pop %v1047
        %v1049 = vadd.f32 %v1048, 1.0
        %v1050 = vrcp.pop %v1049
        %v1051 = vmul.f32 1.0, %v1050
        %1053 = vrot.lane.b32.xlu0 %v1051, 64
        %v1054 = vpop.permute.xlu0 %1053
        %vm1056 = vcmask 785920
        %1057 = vst.msk [vmem:[%s256] sm:$0xff] %vm1056, %v1054
        %v1058 = vld [vmem:[#allocation7 + $0x1c0] sm:$0xff]
        %v1059 = vld [vmem:[#allocation7 + $0x1c8] sm:$0xff]
        %v1060 = vld [vmem:[#allocation7 + $0x1d0] sm:$0xff]
        %v1061 = vld [vmem:[#allocation7 + $0x1d8] sm:$0xff]
        %v1062 = vld [vmem:[#allocation7 + $0x1e0] sm:$0xff]
        %v1063 = vld [vmem:[#allocation7 + $0x1e8] sm:$0xff]
        %v1064 = vld [vmem:[#allocation7 + $0x1f0] sm:$0xff]
        %v1065 = vld [vmem:[#allocation7 + $0x1f8] sm:$0xff]
        %v1066 = vld [vmem:[#allocation7 + $0x200] sm:$0xff]
        %v1067 = vld [vmem:[#allocation7 + $0x208] sm:$0xff]
        %v1068 = vld [vmem:[#allocation7 + $0x210] sm:$0xff]
        %v1069 = vld [vmem:[#allocation7 + $0x218] sm:$0xff]
        %v1070 = vld [vmem:[#allocation7 + $0x220] sm:$0xff]
        %v1071 = vld [vmem:[#allocation7 + $0x228] sm:$0xff]
        %v1072 = vld [vmem:[#allocation7 + $0x230] sm:$0xff]
        %v1073 = vld [vmem:[#allocation7 + $0x238] sm:$0xff]
        %v1074 = vld [vmem:[#allocation7 + $0x240] sm:$0xff]
        %v1075 = vld [vmem:[#allocation7 + $0x248] sm:$0xff]
        %v1076 = vld [vmem:[#allocation7 + $0x250] sm:$0xff]
        %v1077 = vld [vmem:[#allocation7 + $0x258] sm:$0xff]
        %v1078 = vld [vmem:[#allocation7 + $0x260] sm:$0xff]
        %v1079 = vld [vmem:[#allocation7 + $0x268] sm:$0xff]
        %v1080 = vld [vmem:[#allocation7 + $0x270] sm:$0xff]
        %v1081 = vld [vmem:[#allocation7 + $0x278] sm:$0xff]
        %v1082 = vld [vmem:[#allocation7 + $0x280] sm:$0xff]
        %v1083 = vld [vmem:[#allocation7 + $0x288] sm:$0xff]
        %v1084 = vld [vmem:[#allocation7 + $0x290] sm:$0xff]
        %v1085 = vld [vmem:[#allocation7 + $0x298] sm:$0xff]
        %v1086 = vsel %vm278, %v1051, 0
        %1088 = vmatprep.subr.mxu0 0.0
        %1089 = vmatpush1.msra.mxu0 %v1058
        %1090 = vmatprep.subr.mxu0 0.0
        %1091 = vmatpush1.msra.mxu0 %v1059
        %1092 = vmatprep.subr.mxu0 0.0
        %1093 = vmatpush1.msra.mxu0 %v1060
        %1094 = vmatprep.subr.mxu0 0.0
        %1095 = vmatpush1.msra.mxu0 %v1061
        %1096 = vmatprep.subr.mxu0 0.0
        %1097 = vmatpush1.msra.mxu0 0.0
        %1098 = vmatprep.subr.mxu0 0.0
        %1099 = vmatpush1.msra.mxu0 0.0
        %1100 = vmatprep.subr.mxu0 0.0
        %1101 = vmatpush1.msra.mxu0 0.0
        %1102 = vmatprep.subr.mxu0 0.0
        %1103 = vmatpush1.msra.mxu0 0.0
        %1104 = vmatprep.subr.mxu0 0.0
        %1105 = vmatpush1.msra.mxu0 0.0
        %1106 = vmatprep.subr.mxu0 0.0
        %1107 = vmatpush1.msra.mxu0 0.0
        %1108 = vmatprep.subr.mxu0 0.0
        %1109 = vmatpush1.msra.mxu0 0.0
        %1110 = vmatprep.subr.mxu0 0.0
        %1111 = vmatpush1.msra.mxu0 0.0
        %1112 = vmatprep.subr.mxu0 0.0
        %1113 = vmatpush1.msra.mxu0 0.0
        %1114 = vmatprep.subr.mxu0 0.0
        %1115 = vmatpush1.msra.mxu0 0.0
        %1116 = vmatprep.subr.mxu0 0.0
        %1117 = vmatpush1.msra.mxu0 0.0
        %1118 = vmatprep.subr.mxu0 0.0
        %1119 = vmatpush1.msra.mxu0 0.0
        %1120 = vmatprep.subr.mxu0 0.0
        %1121 = vmatpush1.msra.mxu0 0.0
        %1122 = vmatprep.subr.mxu0 0.0
        %1123 = vmatpush1.msra.mxu0 0.0
        %1124 = vmatprep.subr.mxu0 0.0
        %1125 = vmatpush1.msra.mxu0 0.0
        %1126 = vmatprep.subr.mxu0 0.0
        %1127 = vmatpush1.msra.mxu0 0.0
        %1128 = vmatprep.subr.mxu0 0.0
        %1129 = vmatpush1.msra.mxu0 0.0
        %1130 = vmatprep.subr.mxu0 0.0
        %1131 = vmatpush1.msra.mxu0 0.0
        %1132 = vmatprep.subr.mxu0 0.0
        %1133 = vmatpush1.msra.mxu0 0.0
        %1134 = vmatprep.subr.mxu0 0.0
        %1135 = vmatpush1.msra.mxu0 0.0
        %1136 = vmatprep.subr.mxu0 0.0
        %1137 = vmatpush1.msra.mxu0 0.0
        %1138 = vmatprep.subr.mxu0 0.0
        %1139 = vmatpush1.msra.mxu0 0.0
        %1140 = vmatprep.subr.mxu0 0.0
        %1141 = vmatpush1.msra.mxu0 0.0
        %1142 = vmatprep.subr.mxu0 0.0
        %1143 = vmatpush1.msra.mxu0 0.0
        %1144 = vmatprep.subr.mxu0 0.0
        %1145 = vmatpush1.msra.mxu0 0.0
        %1146 = vmatprep.subr.mxu0 0.0
        %1147 = vmatpush1.msra.mxu0 0.0
        %1148 = vmatprep.subr.mxu0 0.0
        %1149 = vmatpush1.msra.mxu0 0.0
        %1150 = vmatprep.subr.mxu0 0.0
        %1151 = vmatpush1.msra.mxu0 0.0
        %1152 = vmatprep.mubr.f32.mxu0 0.0
        %1153 = vmatmul.mubr.f32.gmra.mrb[0].mxu0 %v1086
        %v1154 = vpop.f32.mrb[0].mxu0
        %v1155 = vadd.f32 %v420, %v1154
        %v1156 = vpop.f32.mrb[0].mxu0
        %1157 = vdwg.mxu0
        %v1158 = vlaneseq
        %v1159 = vshrl.u32 %v1158, 7
        %v1160 = vsub.s32 6, %v1159
        %v1161 = vrot.slane %v494, %v1160
        %v1162 = vadd.f32 %v1155, %v1161
        %vm1163 = vcmp.ge.f32.partialorder %v1162, 0.0
        %v1164 = vmul.f32 %v1162, 0.01
        %v1165 = vsel %vm1163, %v1162, %v1164
        %v1166 = vlaneseq
        %v1167 = vshrl.u32 %v1166, 7
        %v1168 = vsub.s32 7, %v1167
        %v1169 = vrot.slane %v494, %v1168
        %1170 = vmatprep.subr.mxu0 0.0
        %1171 = vmatpush1.msra.mxu0 %v1062
        %1172 = vmatprep.subr.mxu0 0.0
        %1173 = vmatpush1.msra.mxu0 %v1063
        %1174 = vmatprep.subr.mxu0 0.0
        %1175 = vmatpush1.msra.mxu0 %v1064
        %1176 = vmatprep.subr.mxu0 0.0
        %1177 = vmatpush1.msra.mxu0 %v1065
        %1178 = vmatprep.subr.mxu0 0.0
        %1179 = vmatpush1.msra.mxu0 %v1066
        %1180 = vmatprep.subr.mxu0 0.0
        %1181 = vmatpush1.msra.mxu0 %v1067
        %1182 = vmatprep.subr.mxu0 0.0
        %1183 = vmatpush1.msra.mxu0 %v1068
        %1184 = vmatprep.subr.mxu0 0.0
        %1185 = vmatpush1.msra.mxu0 %v1069
        %1186 = vmatprep.subr.mxu0 0.0
        %1187 = vmatpush1.msra.mxu0 %v1070
        %1188 = vmatprep.subr.mxu0 0.0
        %1189 = vmatpush1.msra.mxu0 %v1071
        %1190 = vmatprep.subr.mxu0 0.0
        %1191 = vmatpush1.msra.mxu0 %v1072
        %1192 = vmatprep.subr.mxu0 0.0
        %1193 = vmatpush1.msra.mxu0 %v1073
        %1194 = vmatprep.subr.mxu0 0.0
        %1195 = vmatpush1.msra.mxu0 %v1074
        %1196 = vmatprep.subr.mxu0 0.0
        %1197 = vmatpush1.msra.mxu0 %v1075
        %1198 = vmatprep.subr.mxu0 0.0
        %1199 = vmatpush1.msra.mxu0 %v1076
        %1200 = vmatprep.subr.mxu0 0.0
        %1201 = vmatpush1.msra.mxu0 %v1077
        %1202 = vmatprep.subr.mxu0 0.0
        %1203 = vmatpush1.msra.mxu0 0.0
        %1204 = vmatprep.subr.mxu0 0.0
        %1205 = vmatpush1.msra.mxu0 0.0
        %1206 = vmatprep.subr.mxu0 0.0
        %1207 = vmatpush1.msra.mxu0 0.0
        %1208 = vmatprep.subr.mxu0 0.0
        %1209 = vmatpush1.msra.mxu0 0.0
        %1210 = vmatprep.subr.mxu0 0.0
        %1211 = vmatpush1.msra.mxu0 0.0
        %1212 = vmatprep.subr.mxu0 0.0
        %1213 = vmatpush1.msra.mxu0 0.0
        %1214 = vmatprep.subr.mxu0 0.0
        %1215 = vmatpush1.msra.mxu0 0.0
        %1216 = vmatprep.subr.mxu0 0.0
        %1217 = vmatpush1.msra.mxu0 0.0
        %1218 = vmatprep.subr.mxu0 0.0
        %1219 = vmatpush1.msra.mxu0 0.0
        %1220 = vmatprep.subr.mxu0 0.0
        %1221 = vmatpush1.msra.mxu0 0.0
        %1222 = vmatprep.subr.mxu0 0.0
        %1223 = vmatpush1.msra.mxu0 0.0
        %1224 = vmatprep.subr.mxu0 0.0
        %1225 = vmatpush1.msra.mxu0 0.0
        %1226 = vmatprep.subr.mxu0 0.0
        %1227 = vmatpush1.msra.mxu0 0.0
        %1228 = vmatprep.subr.mxu0 0.0
        %1229 = vmatpush1.msra.mxu0 0.0
        %1230 = vmatprep.subr.mxu0 0.0
        %1231 = vmatpush1.msra.mxu0 0.0
        %1232 = vmatprep.subr.mxu0 0.0
        %1233 = vmatpush1.msra.mxu0 0.0
        %1234 = vmatprep.mubr.f32.mxu0 0.0
        %1235 = vmatmul.mubr.f32.gmra.mrb[0].mxu0 %v1165
        %v1236 = vpop.f32.mrb[0].mxu0
        %v1237 = vadd.f32 %v1169, %v1236
        %v1238 = vpop.f32.mrb[0].mxu0
        %1239 = vdwg.mxu0
        %vm1240 = vcmp.ge.f32.partialorder %v1237, 0.0
        %v1241 = vmul.f32 %v1237, 0.01
        %v1242 = vsel %vm1240, %v1237, %v1241
        %v1243 = vlaneseq
        %v1244 = vshrl.u32 %v1243, 7
        %v1245 = vsub.s32 0, %v1244
        %v1246 = vrot.slane %v495, %v1245
        %v1248 = vsel %vm698, %v1242, 0
        %1250 = vmatprep.subr.mxu0 0.0
        %1251 = vmatpush1.msra.mxu0 %v1078
        %1252 = vmatprep.subr.mxu0 0.0
        %1253 = vmatpush1.msra.mxu0 %v1079
        %1254 = vmatprep.subr.mxu0 0.0
        %1255 = vmatpush1.msra.mxu0 %v1080
        %1256 = vmatprep.subr.mxu0 0.0
        %1257 = vmatpush1.msra.mxu0 %v1081
        %1258 = vmatprep.subr.mxu0 0.0
        %1259 = vmatpush1.msra.mxu0 %v1082
        %1260 = vmatprep.subr.mxu0 0.0
        %1261 = vmatpush1.msra.mxu0 %v1083
        %1262 = vmatprep.subr.mxu0 0.0
        %1263 = vmatpush1.msra.mxu0 %v1084
        %1264 = vmatprep.subr.mxu0 0.0
        %1265 = vmatpush1.msra.mxu0 %v1085
        %1266 = vmatprep.subr.mxu0 0.0
        %1267 = vmatpush1.msra.mxu0 0.0
        %1268 = vmatprep.subr.mxu0 0.0
        %1269 = vmatpush1.msra.mxu0 0.0
        %1270 = vmatprep.subr.mxu0 0.0
        %1271 = vmatpush1.msra.mxu0 0.0
        %1272 = vmatprep.subr.mxu0 0.0
        %1273 = vmatpush1.msra.mxu0 0.0
        %1274 = vmatprep.subr.mxu0 0.0
        %1275 = vmatpush1.msra.mxu0 0.0
        %1276 = vmatprep.subr.mxu0 0.0
        %1277 = vmatpush1.msra.mxu0 0.0
        %1278 = vmatprep.subr.mxu0 0.0
        %1279 = vmatpush1.msra.mxu0 0.0
        %1280 = vmatprep.subr.mxu0 0.0
        %1281 = vmatpush1.msra.mxu0 0.0
        %1282 = vmatprep.subr.mxu0 0.0
        %1283 = vmatpush1.msra.mxu0 0.0
        %1284 = vmatprep.subr.mxu0 0.0
        %1285 = vmatpush1.msra.mxu0 0.0
        %1286 = vmatprep.subr.mxu0 0.0
        %1287 = vmatpush1.msra.mxu0 0.0
        %1288 = vmatprep.subr.mxu0 0.0
        %1289 = vmatpush1.msra.mxu0 0.0
        %1290 = vmatprep.subr.mxu0 0.0
        %1291 = vmatpush1.msra.mxu0 0.0
        %1292 = vmatprep.subr.mxu0 0.0
        %1293 = vmatpush1.msra.mxu0 0.0
        %1294 = vmatprep.subr.mxu0 0.0
        %1295 = vmatpush1.msra.mxu0 0.0
        %1296 = vmatprep.subr.mxu0 0.0
        %1297 = vmatpush1.msra.mxu0 0.0
        %1298 = vmatprep.subr.mxu0 0.0
        %1299 = vmatpush1.msra.mxu0 0.0
        %1300 = vmatprep.subr.mxu0 0.0
        %1301 = vmatpush1.msra.mxu0 0.0
        %1302 = vmatprep.subr.mxu0 0.0
        %1303 = vmatpush1.msra.mxu0 0.0
        %1304 = vmatprep.subr.mxu0 0.0
        %1305 = vmatpush1.msra.mxu0 0.0
        %1306 = vmatprep.subr.mxu0 0.0
        %1307 = vmatpush1.msra.mxu0 0.0
        %1308 = vmatprep.subr.mxu0 0.0
        %1309 = vmatpush1.msra.mxu0 0.0
        %1310 = vmatprep.subr.mxu0 0.0
        %1311 = vmatpush1.msra.mxu0 0.0
        %1312 = vmatprep.subr.mxu0 0.0
        %1313 = vmatpush1.msra.mxu0 0.0
        %1314 = vmatprep.mubr.f32.mxu0 0.0
        %1315 = vmatmul.mubr.f32.gmra.mrb[0].mxu0 %v1248
        %v1316 = vpop.f32.mrb[0].mxu0
        %v1317 = vadd.f32 %v1246, %v1316
        %v1318 = vpop.f32.mrb[0].mxu0
        %1319 = vdwg.mxu0
        %v1320 = vxor.u32 %v1317, 2147483648
        %v1321 = vmul.f32 %v1320, 1.442695
        %v1322 = vpow.pop %v1321
        %v1323 = vadd.f32 %v1322, 1.0
        %v1324 = vrcp.pop %v1323
        %v1325 = vmul.f32 1.0, %v1324
        %1327 = vrot.lane.b32.xlu0 %v1325, 96
        %v1328 = vpop.permute.xlu0 %1327
        %vm1330 = vcmask 1048320
        %1331 = vst.msk [vmem:[%s256] sm:$0xff] %vm1330, %v1328
        %v1332 = vld [vmem:[#allocation7 + $0x2a0] sm:$0xff]
        %v1333 = vld [vmem:[#allocation7 + $0x2a8] sm:$0xff]
        %v1334 = vld [vmem:[#allocation7 + $0x2b0] sm:$0xff]
        %v1335 = vld [vmem:[#allocation7 + $0x2b8] sm:$0xff]
        %v1336 = vld [vmem:[#allocation7 + $0x2c0] sm:$0xff]
        %v1337 = vld [vmem:[#allocation7 + $0x2c8] sm:$0xff]
        %v1338 = vld [vmem:[#allocation7 + $0x2d0] sm:$0xff]
        %v1339 = vld [vmem:[#allocation7 + $0x2d8] sm:$0xff]
        %v1340 = vld [vmem:[#allocation7 + $0x2e0] sm:$0xff]
        %v1341 = vld [vmem:[#allocation7 + $0x2e8] sm:$0xff]
        %v1342 = vld [vmem:[#allocation7 + $0x2f0] sm:$0xff]
        %v1343 = vld [vmem:[#allocation7 + $0x2f8] sm:$0xff]
        %v1344 = vld [vmem:[#allocation7 + $0x300] sm:$0xff]
        %v1345 = vld [vmem:[#allocation7 + $0x308] sm:$0xff]
        %v1346 = vld [vmem:[#allocation7 + $0x310] sm:$0xff]
        %v1347 = vld [vmem:[#allocation7 + $0x318] sm:$0xff]
        %v1348 = vld [vmem:[#allocation7 + $0x320] sm:$0xff]
        %v1349 = vld [vmem:[#allocation7 + $0x328] sm:$0xff]
        %v1350 = vld [vmem:[#allocation7 + $0x330] sm:$0xff]
        %v1351 = vld [vmem:[#allocation7 + $0x338] sm:$0xff]
        %v1352 = vld [vmem:[#allocation7 + $0x340] sm:$0xff]
        %v1353 = vld [vmem:[#allocation7 + $0x348] sm:$0xff]
        %v1354 = vld [vmem:[#allocation7 + $0x350] sm:$0xff]
        %v1355 = vld [vmem:[#allocation7 + $0x358] sm:$0xff]
        %v1356 = vld [vmem:[#allocation7 + $0x360] sm:$0xff]
        %v1357 = vld [vmem:[#allocation7 + $0x368] sm:$0xff]
        %v1358 = vld [vmem:[#allocation7 + $0x370] sm:$0xff]
        %v1359 = vld [vmem:[#allocation7 + $0x378] sm:$0xff]
        %v1360 = vsel %vm278, %v1325, 0
        %1362 = vmatprep.subr.mxu0 0.0
        %1363 = vmatpush1.msra.mxu0 %v1332
        %1364 = vmatprep.subr.mxu0 0.0
        %1365 = vmatpush1.msra.mxu0 %v1333
        %1366 = vmatprep.subr.mxu0 0.0
        %1367 = vmatpush1.msra.mxu0 %v1334
        %1368 = vmatprep.subr.mxu0 0.0
        %1369 = vmatpush1.msra.mxu0 %v1335
        %1370 = vmatprep.subr.mxu0 0.0
        %1371 = vmatpush1.msra.mxu0 0.0
        %1372 = vmatprep.subr.mxu0 0.0
        %1373 = vmatpush1.msra.mxu0 0.0
        %1374 = vmatprep.subr.mxu0 0.0
        %1375 = vmatpush1.msra.mxu0 0.0
        %1376 = vmatprep.subr.mxu0 0.0
        %1377 = vmatpush1.msra.mxu0 0.0
        %1378 = vmatprep.subr.mxu0 0.0
        %1379 = vmatpush1.msra.mxu0 0.0
        %1380 = vmatprep.subr.mxu0 0.0
        %1381 = vmatpush1.msra.mxu0 0.0
        %1382 = vmatprep.subr.mxu0 0.0
        %1383 = vmatpush1.msra.mxu0 0.0
        %1384 = vmatprep.subr.mxu0 0.0
        %1385 = vmatpush1.msra.mxu0 0.0
        %1386 = vmatprep.subr.mxu0 0.0
        %1387 = vmatpush1.msra.mxu0 0.0
        %1388 = vmatprep.subr.mxu0 0.0
        %1389 = vmatpush1.msra.mxu0 0.0
        %1390 = vmatprep.subr.mxu0 0.0
        %1391 = vmatpush1.msra.mxu0 0.0
        %1392 = vmatprep.subr.mxu0 0.0
        %1393 = vmatpush1.msra.mxu0 0.0
        %1394 = vmatprep.subr.mxu0 0.0
        %1395 = vmatpush1.msra.mxu0 0.0
        %1396 = vmatprep.subr.mxu0 0.0
        %1397 = vmatpush1.msra.mxu0 0.0
        %1398 = vmatprep.subr.mxu0 0.0
        %1399 = vmatpush1.msra.mxu0 0.0
        %1400 = vmatprep.subr.mxu0 0.0
        %1401 = vmatpush1.msra.mxu0 0.0
        %1402 = vmatprep.subr.mxu0 0.0
        %1403 = vmatpush1.msra.mxu0 0.0
        %1404 = vmatprep.subr.mxu0 0.0
        %1405 = vmatpush1.msra.mxu0 0.0
        %1406 = vmatprep.subr.mxu0 0.0
        %1407 = vmatpush1.msra.mxu0 0.0
        %1408 = vmatprep.subr.mxu0 0.0
        %1409 = vmatpush1.msra.mxu0 0.0
        %1410 = vmatprep.subr.mxu0 0.0
        %1411 = vmatpush1.msra.mxu0 0.0
        %1412 = vmatprep.subr.mxu0 0.0
        %1413 = vmatpush1.msra.mxu0 0.0
        %1414 = vmatprep.subr.mxu0 0.0
        %1415 = vmatpush1.msra.mxu0 0.0
        %1416 = vmatprep.subr.mxu0 0.0
        %1417 = vmatpush1.msra.mxu0 0.0
        %1418 = vmatprep.subr.mxu0 0.0
        %1419 = vmatpush1.msra.mxu0 0.0
        %1420 = vmatprep.subr.mxu0 0.0
        %1421 = vmatpush1.msra.mxu0 0.0
        %1422 = vmatprep.subr.mxu0 0.0
        %1423 = vmatpush1.msra.mxu0 0.0
        %1424 = vmatprep.subr.mxu0 0.0
        %1425 = vmatpush1.msra.mxu0 0.0
        %1426 = vmatprep.mubr.f32.mxu0 0.0
        %1427 = vmatmul.mubr.f32.gmra.mrb[0].mxu0 %v1360
        %v1428 = vpop.f32.mrb[0].mxu0
        %v1429 = vadd.f32 %v422, %v1428
        %v1430 = vpop.f32.mrb[0].mxu0
        %1431 = vdwg.mxu0
        %v1432 = vlaneseq
        %v1433 = vshrl.u32 %v1432, 7
        %v1434 = vsub.s32 1, %v1433
        %v1435 = vrot.slane %v495, %v1434
        %v1436 = vadd.f32 %v1429, %v1435
        %vm1437 = vcmp.ge.f32.partialorder %v1436, 0.0
        %v1438 = vmul.f32 %v1436, 0.01
        %v1439 = vsel %vm1437, %v1436, %v1438
        %v1440 = vlaneseq
        %v1441 = vshrl.u32 %v1440, 7
        %v1442 = vsub.s32 2, %v1441
        %v1443 = vrot.slane %v495, %v1442
        %1444 = vmatprep.subr.mxu0 0.0
        %1445 = vmatpush1.msra.mxu0 %v1336
        %1446 = vmatprep.subr.mxu0 0.0
        %1447 = vmatpush1.msra.mxu0 %v1337
        %1448 = vmatprep.subr.mxu0 0.0
        %1449 = vmatpush1.msra.mxu0 %v1338
        %1450 = vmatprep.subr.mxu0 0.0
        %1451 = vmatpush1.msra.mxu0 %v1339
        %1452 = vmatprep.subr.mxu0 0.0
        %1453 = vmatpush1.msra.mxu0 %v1340
        %1454 = vmatprep.subr.mxu0 0.0
        %1455 = vmatpush1.msra.mxu0 %v1341
        %1456 = vmatprep.subr.mxu0 0.0
        %1457 = vmatpush1.msra.mxu0 %v1342
        %1458 = vmatprep.subr.mxu0 0.0
        %1459 = vmatpush1.msra.mxu0 %v1343
        %1460 = vmatprep.subr.mxu0 0.0
        %1461 = vmatpush1.msra.mxu0 %v1344
        %1462 = vmatprep.subr.mxu0 0.0
        %1463 = vmatpush1.msra.mxu0 %v1345
        %1464 = vmatprep.subr.mxu0 0.0
        %1465 = vmatpush1.msra.mxu0 %v1346
        %1466 = vmatprep.subr.mxu0 0.0
        %1467 = vmatpush1.msra.mxu0 %v1347
        %1468 = vmatprep.subr.mxu0 0.0
        %1469 = vmatpush1.msra.mxu0 %v1348
        %1470 = vmatprep.subr.mxu0 0.0
        %1471 = vmatpush1.msra.mxu0 %v1349
        %1472 = vmatprep.subr.mxu0 0.0
        %1473 = vmatpush1.msra.mxu0 %v1350
        %1474 = vmatprep.subr.mxu0 0.0
        %1475 = vmatpush1.msra.mxu0 %v1351
        %1476 = vmatprep.subr.mxu0 0.0
        %1477 = vmatpush1.msra.mxu0 0.0
        %1478 = vmatprep.subr.mxu0 0.0
        %1479 = vmatpush1.msra.mxu0 0.0
        %1480 = vmatprep.subr.mxu0 0.0
        %1481 = vmatpush1.msra.mxu0 0.0
        %1482 = vmatprep.subr.mxu0 0.0
        %1483 = vmatpush1.msra.mxu0 0.0
        %1484 = vmatprep.subr.mxu0 0.0
        %1485 = vmatpush1.msra.mxu0 0.0
        %1486 = vmatprep.subr.mxu0 0.0
        %1487 = vmatpush1.msra.mxu0 0.0
        %1488 = vmatprep.subr.mxu0 0.0
        %1489 = vmatpush1.msra.mxu0 0.0
        %1490 = vmatprep.subr.mxu0 0.0
        %1491 = vmatpush1.msra.mxu0 0.0
        %1492 = vmatprep.subr.mxu0 0.0
        %1493 = vmatpush1.msra.mxu0 0.0
        %1494 = vmatprep.subr.mxu0 0.0
        %1495 = vmatpush1.msra.mxu0 0.0
        %1496 = vmatprep.subr.mxu0 0.0
        %1497 = vmatpush1.msra.mxu0 0.0
        %1498 = vmatprep.subr.mxu0 0.0
        %1499 = vmatpush1.msra.mxu0 0.0
        %1500 = vmatprep.subr.mxu0 0.0
        %1501 = vmatpush1.msra.mxu0 0.0
        %1502 = vmatprep.subr.mxu0 0.0
        %1503 = vmatpush1.msra.mxu0 0.0
        %1504 = vmatprep.subr.mxu0 0.0
        %1505 = vmatpush1.msra.mxu0 0.0
        %1506 = vmatprep.subr.mxu0 0.0
        %1507 = vmatpush1.msra.mxu0 0.0
        %1508 = vmatprep.mubr.f32.mxu0 0.0
        %1509 = vmatmul.mubr.f32.gmra.mrb[0].mxu0 %v1439
        %v1510 = vpop.f32.mrb[0].mxu0
        %v1511 = vadd.f32 %v1443, %v1510
        %v1512 = vpop.f32.mrb[0].mxu0
        %1513 = vdwg.mxu0
        %vm1514 = vcmp.ge.f32.partialorder %v1511, 0.0
        %v1515 = vmul.f32 %v1511, 0.01
        %v1516 = vsel %vm1514, %v1511, %v1515
        %v1517 = vlaneseq
        %v1518 = vshrl.u32 %v1517, 7
        %v1519 = vsub.s32 3, %v1518
        %v1520 = vrot.slane %v495, %v1519
        %v1522 = vsel %vm698, %v1516, 0
        %1524 = vmatprep.subr.mxu0 0.0
        %1525 = vmatpush1.msra.mxu0 %v1352
        %1526 = vmatprep.subr.mxu0 0.0
        %1527 = vmatpush1.msra.mxu0 %v1353
        %1528 = vmatprep.subr.mxu0 0.0
        %1529 = vmatpush1.msra.mxu0 %v1354
        %1530 = vmatprep.subr.mxu0 0.0
        %1531 = vmatpush1.msra.mxu0 %v1355
        %1532 = vmatprep.subr.mxu0 0.0
        %1533 = vmatpush1.msra.mxu0 %v1356
        %1534 = vmatprep.subr.mxu0 0.0
        %1535 = vmatpush1.msra.mxu0 %v1357
        %1536 = vmatprep.subr.mxu0 0.0
        %1537 = vmatpush1.msra.mxu0 %v1358
        %1538 = vmatprep.subr.mxu0 0.0
        %1539 = vmatpush1.msra.mxu0 %v1359
        %1540 = vmatprep.subr.mxu0 0.0
        %1541 = vmatpush1.msra.mxu0 0.0
        %1542 = vmatprep.subr.mxu0 0.0
        %1543 = vmatpush1.msra.mxu0 0.0
        %1544 = vmatprep.subr.mxu0 0.0
        %1545 = vmatpush1.msra.mxu0 0.0
        %1546 = vmatprep.subr.mxu0 0.0
        %1547 = vmatpush1.msra.mxu0 0.0
        %1548 = vmatprep.subr.mxu0 0.0
        %1549 = vmatpush1.msra.mxu0 0.0
        %1550 = vmatprep.subr.mxu0 0.0
        %1551 = vmatpush1.msra.mxu0 0.0
        %1552 = vmatprep.subr.mxu0 0.0
        %1553 = vmatpush1.msra.mxu0 0.0
        %1554 = vmatprep.subr.mxu0 0.0
        %1555 = vmatpush1.msra.mxu0 0.0
        %1556 = vmatprep.subr.mxu0 0.0
        %1557 = vmatpush1.msra.mxu0 0.0
        %1558 = vmatprep.subr.mxu0 0.0
        %1559 = vmatpush1.msra.mxu0 0.0
        %1560 = vmatprep.subr.mxu0 0.0
        %1561 = vmatpush1.msra.mxu0 0.0
        %1562 = vmatprep.subr.mxu0 0.0
        %1563 = vmatpush1.msra.mxu0 0.0
        %1564 = vmatprep.subr.mxu0 0.0
        %1565 = vmatpush1.msra.mxu0 0.0
        %1566 = vmatprep.subr.mxu0 0.0
        %1567 = vmatpush1.msra.mxu0 0.0
        %1568 = vmatprep.subr.mxu0 0.0
        %1569 = vmatpush1.msra.mxu0 0.0
        %1570 = vmatprep.subr.mxu0 0.0
        %1571 = vmatpush1.msra.mxu0 0.0
        %1572 = vmatprep.subr.mxu0 0.0
        %1573 = vmatpush1.msra.mxu0 0.0
        %1574 = vmatprep.subr.mxu0 0.0
        %1575 = vmatpush1.msra.mxu0 0.0
        %1576 = vmatprep.subr.mxu0 0.0
        %1577 = vmatpush1.msra.mxu0 0.0
        %1578 = vmatprep.subr.mxu0 0.0
        %1579 = vmatpush1.msra.mxu0 0.0
        %1580 = vmatprep.subr.mxu0 0.0
        %1581 = vmatpush1.msra.mxu0 0.0
        %1582 = vmatprep.subr.mxu0 0.0
        %1583 = vmatpush1.msra.mxu0 0.0
        %1584 = vmatprep.subr.mxu0 0.0
        %1585 = vmatpush1.msra.mxu0 0.0
        %1586 = vmatprep.subr.mxu0 0.0
        %1587 = vmatpush1.msra.mxu0 0.0
        %1588 = vmatprep.mubr.f32.mxu0 0.0
        %1589 = vmatmul.mubr.f32.gmra.mrb[0].mxu0 %v1522
        %v1590 = vpop.f32.mrb[0].mxu0
        %v1591 = vadd.f32 %v1520, %v1590
        %v1592 = vpop.f32.mrb[0].mxu0
        %1593 = vdwg.mxu0
        %v1594 = vxor.u32 %v1591, 2147483648
        %v1595 = vmul.f32 %v1594, 1.442695
        %v1596 = vpow.pop %v1595
        %v1597 = vadd.f32 %v1596, 1.0
        %v1598 = vrcp.pop %v1597
        %v1599 = vmul.f32 1.0, %v1598
        %1600 = vst.msk [vmem:[%s256 + $0x8] sm:$0xff] %vm278, %v1599
        %s1601 = sand.u32 %s120, 1
        %s1602 = scalar_lea.sflag [#allocation4], %s1601
        %s1603 = sand.u32 %s120, 1
        %s1604 = smul.addr %s1603, 16
        %s1605 = scalar_lea.vmem [#allocation10], %s1604
        // Predicated region
        $region53: #{tpu_custom_call.1} parent=35 // pred_check
          %p1606 = pneg %p130
        $region54: #{tpu_custom_call.1} parent=35 // pred_check_branch
          %1608 = sbr.rel (%p1606) target = $region56
        $region55: #{tpu_custom_call.1} parent=35 // pred_region
          %s1610 = ssub.s32 256, 256
          %1611 = vsyncadd %s1602, %s1610
          %s1612 = smul.addr %s23, 2
          %s1613 = smul.addr %s1612, 128
          %s1614 = scalar_lea.hbm %s4, %s1613
          %s1616 = sshll.u32 %s1605, 4
          %s1617 = int_to_ptr.vmem [resolvable:$true] %s1616
          %1619 = dma.vmem_to_hbm [thread:$0]  %s1617, 256, %s1614, %s1602
        $region56: #{tpu_custom_call.1} parent=35 // pred_fallthru
          _
      $region36: #{tpu_custom_call.1} parent=5 // pred_fallthru
        _
      %p1620 = scmp.le.s32.totalorder 2, %s18
      // Predicated region
      $region57: #{tpu_custom_call.1} parent=5 // pred_check
        %p1621 = pneg %p1620
      $region58: #{tpu_custom_call.1} parent=5 // pred_check_branch
        %1623 = sbr.rel (%p1621) target = $region60
      $region59: #{tpu_custom_call.1} parent=5 // pred_region
        %s1624 = ssub.s32 %s18, 2
        // Predicated region
        $region61: #{tpu_custom_call.1} parent=59 // pred_check
          %p1625 = pneg %p136
        $region62: #{tpu_custom_call.1} parent=59 // pred_check_branch
          %1627 = sbr.rel (%p1625) target = $region64
        $region63: #{tpu_custom_call.1} parent=59 // pred_region
          %s1628 = sand.u32 %s121, 1
          %s1629 = scalar_lea.sflag [#allocation4], %s1628
          %s1630 = sand.u32 %s121, 1
          %s1631 = smul.addr %s1630, 16
          %s1632 = scalar_lea.vmem [#allocation10], %s1631
          %1633 = dma.done %s1629, 256
        $region64: #{tpu_custom_call.1} parent=59 // pred_fallthru
          _
      $region60: #{tpu_custom_call.1} parent=5 // pred_fallthru
        _
    $region6: #{tpu_custom_call.1} parent=1 // loop_footer
      %s22 = sadd.s32 1, %s18
    $region7: #{tpu_custom_call.1} parent=1 // loop_footer_branch
      %17 = sbr.rel target = $region3
    $region8: #{tpu_custom_call.1} parent=1 // loop_exit
      _
    %1634 = vsyncpa [#allocation3], 1
    %s1635 = scalar_lea.sflag [#allocation3], 1
    %1636 = vsyncpa %s1635, 1
    %1637 = vsyncpa [#allocation6], 1
    %1638 = vsyncpa [#allocation9], 1
    %1639 = vsyncpa [#allocation4], 1
    %s1640 = scalar_lea.sflag [#allocation4], 1
    %1641 = vsyncpa %s1640, 1

</llo_original>
